<compile_context>
chip_gen: v7x
topology: tpu7x:2x2x1
jax: 0.10.0
libtpu: 0.0.40
codegen_flags: <defaults>
</compile_context>

<pallas_src>
import functools

import jax
import jax.numpy as jnp
from jax.experimental import pallas as pl
from jax.experimental.pallas import tpu as pltpu


def _attention_kernel(img_ref, hid_ref,
                      wu_ref, buw_ref,
                      ww_ref, wv_ref, bv_ref,
                      ctx_ref, alpha_ref, *, matmul_dtype=None):
    img = img_ref[...]                         # (TB, L, D_enc) f32
    TB, L, D = img.shape
    hid = hid_ref[...]                         # (TB, H) f32

    wu = wu_ref[...]                           # (H, H)
    ww = ww_ref[...]                           # (D_enc, H)

    if matmul_dtype is not None:
        hid_mm, wu_mm = hid.astype(matmul_dtype), wu.astype(matmul_dtype)
        img_mm, ww_mm = img.astype(matmul_dtype), ww.astype(matmul_dtype)
    else:
        hid_mm, wu_mm, img_mm, ww_mm = hid, wu, img, ww

    # U_h = U(hidden_state) + (b_U + b_W)   (W's bias folded in here: added once
    # per batch row instead of once per (row, region) pair)    -> (TB, H)
    u_h = jnp.dot(hid_mm, wu_mm, preferred_element_type=jnp.float32) + buw_ref[...]

    # W_s = W(img_features) as ONE large-M MXU matmul           -> (TB*L, H)
    img2d = img_mm.reshape(TB * L, D)          # layout-free for L % 8 == 0
    w_s = jnp.dot(img2d, ww_mm, preferred_element_type=jnp.float32)
    w_s = w_s.reshape(TB, L, -1)               # (TB, L, H)

    # att = tanh(W_s + U_h)  (broadcast over L), f32 on the EUP/VPU
    att = jnp.tanh(w_s + u_h[:, None, :])      # (TB, L, H)

    # e = v(att): VPU multiply + lane reduce against v stored as a (1, H) row.
    # Result is lane-dense (TB, L) -- no (L, 1) column, no transpose.
    v_row = wv_ref[...]                        # (1, H)
    e = jnp.sum(att * v_row[None, :, :], axis=-1) + bv_ref[0]      # (TB, L)

    # softmax over L (lane axis)
    m = jnp.max(e, axis=-1, keepdims=True)     # (TB, 1)
    p = jnp.exp(e - m)                         # (TB, L)
    s = jnp.sum(p, axis=-1, keepdims=True)     # (TB, 1)
    alpha = p / s                              # exact div keeps the 1e-5 tolerance

    # context = sum_L img * alpha -> (TB, D_enc); VPU mul + sublane reduce (L small)
    ctx = jnp.sum(img * alpha[:, :, None], axis=1)                 # (TB, D_enc)

    ctx_ref[...] = ctx.astype(ctx_ref.dtype)
    alpha_ref[...] = alpha.astype(alpha_ref.dtype)


def _vmem_limit_bytes():
    """Generation-aware VMEM limit with a safe (v7x 64 MiB) fallback."""
    phys = 64 << 20
    try:
        info = pltpu.get_tpu_info()
        cap = int(getattr(info, "vmem_capacity_bytes", 0) or 0)
        if cap > 0:
            phys = cap
    except Exception:
        pass
    # Use at most half of physical VMEM, never more than 64 MiB, leaving headroom
    # for compiler scratch.  Fallback -> 32 MiB, which is safe on every generation.
    return int(min(phys // 2, 64 << 20))


def _choose_batch_tile(B, L, D_enc, H, budget_bytes, itemsize=4):
    """Largest multiple-of-8 batch tile whose per-step footprint fits the budget."""
    per_row = itemsize * (
        2 * L * D_enc          # img tile (double-buffered)
        + 2 * H                # hidden tile (double-buffered)
        + 2 * D_enc + 2 * L    # context / alpha output tiles (double-buffered)
        + 3 * L * H            # w_s + att + exp live intermediates (f32)
        + 2 * D_enc)           # ctx + slack
    tb = budget_bytes // max(per_row, 1)
    tb = max(8, min(256, (tb // 8) * 8))       # 8-row alignment; 256 caps vreg pressure
    b_pad8 = -(-B // 8) * 8
    tb = min(tb, b_pad8)
    # Prefer >= 2 grid steps so v7x's two TensorCores both get work along the
    # "parallel" batch axis -- but never at the cost of dropping TB*L below 256.
    if b_pad8 // tb < 2:
        half = ((-(-b_pad8 // 2) + 7) // 8) * 8
        if half * L >= 256:
            tb = min(tb, half)
    return tb


def attention_pallas(img_features, hidden_state, params, *,
                     batch_tile=None, matmul_dtype=None):
    B, L, D_enc = img_features.shape
    _, H = hidden_state.shape
    wu, bu, ww, bw, wv, bv = params            # (H,H),(1,H),(D_enc,H),(1,H),(H,1),(1,1)

    wv_row = wv.T                              # (1, H) row for the VPU reduce
    b_comb = bu + bw                           # fold W bias into U bias
    bv_flat = bv.reshape((1,))                 # scalar bias -> SMEM

    vmem_limit = _vmem_limit_bytes()
    weight_bytes = 4 * (H * H + D_enc * H + 4 * H)
    tile_budget = max(1 << 20, vmem_limit - 2 * weight_bytes - (2 << 20))

    if batch_tile is None:
        batch_tile = _choose_batch_tile(B, L, D_enc, H, tile_budget)
    TB = int(batch_tile)
    assert TB % 8 == 0, "batch_tile must be a multiple of 8 (sublane alignment)"

    # Pad batch so TB divides it exactly (keeps every 2-D block (8,128)-legal).
    B_padded = -(-B // TB) * TB
    if B_padded != B:
        pad = B_padded - B
        img_features = jnp.pad(img_features, ((0, pad), (0, 0), (0, 0)))
        hidden_state = jnp.pad(hidden_state, ((0, pad), (0, 0)))

    kernel = functools.partial(_attention_kernel, matmul_dtype=matmul_dtype)

    grid_spec = pltpu.PrefetchScalarGridSpec(
        num_scalar_prefetch=0,
        grid=(B_padded // TB,),
        in_specs=[
            pl.BlockSpec((TB, L, D_enc), lambda b: (b, 0, 0)),   # img_features tile
            pl.BlockSpec((TB, H),        lambda b: (b, 0)),      # hidden_state tile
            pl.BlockSpec((H, H),         lambda b: (0, 0)),      # U weight (loop-invariant)
            pl.BlockSpec((1, H),         lambda b: (0, 0)),      # bu + bw (folded bias)
            pl.BlockSpec((D_enc, H),     lambda b: (0, 0)),      # W weight (loop-invariant)
            pl.BlockSpec((1, H),         lambda b: (0, 0)),      # v weight as row
            pl.BlockSpec(memory_space=pltpu.MemorySpace.SMEM),   # v bias scalar in SMEM
        ],
        out_specs=[
            pl.BlockSpec((TB, D_enc), lambda b: (b, 0)),         # context
            pl.BlockSpec((TB, L),     lambda b: (b, 0)),         # alpha
        ],
    )

    context, alpha = pl.pallas_call(
        kernel,
        grid_spec=grid_spec,
        out_shape=(
            jax.ShapeDtypeStruct((B_padded, D_enc), jnp.float32),
            jax.ShapeDtypeStruct((B_padded, L), jnp.float32),
        ),
        compiler_params=pltpu.CompilerParams(
            dimension_semantics=("parallel",),   # lets v7x shard steps over 2 TCs
            vmem_limit_bytes=vmem_limit),
    )(img_features, hidden_state, wu, b_comb, ww, wv_row, bv_flat)

    return context[:B], alpha[:B]


def attention_ref(img_features, hidden_state, params):
    """Pure-JAX reference matching the PyTorch forward exactly."""
    wu, bu, ww, bw, wv, bv = params
    u_h = hidden_state @ wu + bu[0]                 # (B, H)
    w_s = img_features @ ww + bw[0]                 # (B, L, H)
    att = jnp.tanh(w_s + u_h[:, None, :])           # (B, L, H)
    e = (att @ wv)[..., 0] + bv[0, 0]               # (B, L)
    alpha = jax.nn.softmax(e, axis=1)               # (B, L)
    context = jnp.sum(img_features * alpha[..., None], axis=1)  # (B, D_enc)
    return context, alpha


def init_params(key, encoder_dim, lstm_hidden_dim):
    ks = jax.random.split(key, 6)
    scale = 0.1
    wu = scale * jax.random.normal(ks[0], (lstm_hidden_dim, lstm_hidden_dim), jnp.float32)
    bu = scale * jax.random.normal(ks[1], (1, lstm_hidden_dim), jnp.float32)
    ww = scale * jax.random.normal(ks[2], (encoder_dim, lstm_hidden_dim), jnp.float32)
    bw = scale * jax.random.normal(ks[3], (1, lstm_hidden_dim), jnp.float32)
    wv = scale * jax.random.normal(ks[4], (lstm_hidden_dim, 1), jnp.float32)
    bv = scale * jax.random.normal(ks[5], (1, 1), jnp.float32)
    return wu, bu, ww, bw, wv, bv


if __name__ == "__main__":
    # Small but lane/sublane-friendly shapes: 64 batch rows, 8 image regions,
    # 128 encoder dim, 128 LSTM hidden dim -> TB=32, grid=(2,), MXU M=256.
    B, L, ENC_DIM, LSTM_DIM = 64, 8, 128, 128

    key = jax.random.PRNGKey(0)
    k_img, k_hid, k_par = jax.random.split(key, 3)
    img_features = jax.random.normal(k_img, (B, L, ENC_DIM), jnp.float32)
    hidden_state = jax.random.normal(k_hid, (B, LSTM_DIM), jnp.float32)
    params = init_params(k_par, ENC_DIM, LSTM_DIM)

    ctx_ref_, alpha_ref_ = attention_ref(img_features, hidden_state, params)

    # f32 path (default): must match the reference at 1e-5.
    ctx, alpha = attention_pallas(img_features, hidden_state, params)
    jax.block_until_ready((ctx, alpha))
    assert jnp.allclose(ctx, ctx_ref_, atol=1e-5, rtol=1e-5), "context mismatch"
    assert jnp.allclose(alpha, alpha_ref_, atol=1e-5, rtol=1e-5), "alpha mismatch"
    assert jnp.allclose(jnp.sum(alpha, axis=1), 1.0, atol=1e-5), "alpha not normalized"

    # Ragged batch (B not a multiple of 8) exercises the padding path.
    Br = 13
    ctx_r, alpha_r = attention_pallas(img_features[:Br], hidden_state[:Br], params)
    jax.block_until_ready((ctx_r, alpha_r))
    assert ctx_r.shape == (Br, ENC_DIM) and alpha_r.shape == (Br, L)
    assert jnp.allclose(ctx_r, ctx_ref_[:Br], atol=1e-5, rtol=1e-5), "padded context mismatch"
    assert jnp.allclose(alpha_r, alpha_ref_[:Br], atol=1e-5, rtol=1e-5), "padded alpha mismatch"

    # bf16 MXU-operand path (v6e/v7x throughput option): loose sanity bounds only,
    # since bf16 operands cannot meet the 1e-5 tolerance by construction.
    ctx_bf, alpha_bf = attention_pallas(img_features, hidden_state, params,
                                        matmul_dtype=jnp.bfloat16)
    jax.block_until_ready((ctx_bf, alpha_bf))
    assert jnp.allclose(jnp.sum(alpha_bf, axis=1), 1.0, atol=1e-3), "bf16 alpha not normalized"
    assert float(jnp.max(jnp.abs(alpha_bf - alpha_ref_))) < 0.1, "bf16 alpha far off"
    assert float(jnp.max(jnp.abs(ctx_bf - ctx_ref_))) < 0.5, "bf16 context far off"

    print("KERNEL_OK")
</pallas_src>

<mosaic_0001>
module attributes {stable_mosaic.version = 11 : i64} {
  func.func @_attention_kernel(%arg0: i32, %arg1: memref<32x8x128xf32, #tpu.memory_space<vmem>>, %arg2: memref<32x128xf32, #tpu.memory_space<vmem>>, %arg3: memref<128x128xf32, #tpu.memory_space<vmem>>, %arg4: memref<1x128xf32, #tpu.memory_space<vmem>>, %arg5: memref<128x128xf32, #tpu.memory_space<vmem>>, %arg6: memref<1x128xf32, #tpu.memory_space<vmem>>, %arg7: memref<1xf32, #tpu.memory_space<smem>>, %arg8: memref<32x128xf32, #tpu.memory_space<vmem>>, %arg9: memref<32x8xf32, #tpu.memory_space<vmem>>) attributes {dimension_semantics = [#tpu.dimension_semantics<parallel>], iteration_bounds = array<i64: 2>, scalar_prefetch = 0 : i64, scratch_operands = 0 : i64, tpu.core_type = #tpu.core_type<tc>, window_params = [{transform_indices = @transform_0, window_bounds = array<i64: 32, 8, 128>}, {transform_indices = @transform_1, window_bounds = array<i64: 32, 128>}, {pipeline_mode = #tpu.pipeline_mode<synchronous>, transform_indices = @transform_2, window_bounds = array<i64: 128, 128>}, {pipeline_mode = #tpu.pipeline_mode<synchronous>, transform_indices = @transform_3, window_bounds = array<i64: 1, 128>}, {pipeline_mode = #tpu.pipeline_mode<synchronous>, transform_indices = @transform_4, window_bounds = array<i64: 128, 128>}, {pipeline_mode = #tpu.pipeline_mode<synchronous>, transform_indices = @transform_5, window_bounds = array<i64: 1, 128>}, {transform_indices = @transform_6, window_bounds = array<i64: 1>}, {transform_indices = @transform_7, window_bounds = array<i64: 32, 128>}, {transform_indices = @transform_8, window_bounds = array<i64: 32, 8>}]} {
    %c0 = arith.constant 0 : index
    %c0_0 = arith.constant 0 : index
    %c0_1 = arith.constant 0 : index
    %0 = vector.load %arg1[%c0, %c0_0, %c0_1] : memref<32x8x128xf32, #tpu.memory_space<vmem>>, vector<32x8x128xf32>
    %c0_2 = arith.constant 0 : index
    %c0_3 = arith.constant 0 : index
    %1 = vector.load %arg2[%c0_2, %c0_3] : memref<32x128xf32, #tpu.memory_space<vmem>>, vector<32x128xf32>
    %c0_4 = arith.constant 0 : index
    %c0_5 = arith.constant 0 : index
    %2 = vector.load %arg3[%c0_4, %c0_5] : memref<128x128xf32, #tpu.memory_space<vmem>>, vector<128x128xf32>
    %c0_6 = arith.constant 0 : index
    %c0_7 = arith.constant 0 : index
    %3 = vector.load %arg5[%c0_6, %c0_7] : memref<128x128xf32, #tpu.memory_space<vmem>>, vector<128x128xf32>
    %cst = arith.constant dense<0.000000e+00> : vector<32x128xf32>
    %4 = tpu.matmul %1, %2, %cst {dimension_numbers = #tpu.dot_dimension_numbers<[1], [0], [0], [1], [0, 0, 1, 1], [], []>} : vector<32x128xf32>, vector<128x128xf32>, vector<32x128xf32> -> vector<32x128xf32>
    %c0_8 = arith.constant 0 : index
    %c0_9 = arith.constant 0 : index
    %5 = vector.load %arg4[%c0_8, %c0_9] : memref<1x128xf32, #tpu.memory_space<vmem>>, vector<1x128xf32>
    %6 = vector.broadcast %5 : vector<1x128xf32> to vector<32x128xf32>
    %7 = arith.addf %4, %6 : vector<32x128xf32>
    %8 = vector.shape_cast %0 : vector<32x8x128xf32> to vector<256x128xf32>
    %cst_10 = arith.constant dense<0.000000e+00> : vector<256x128xf32>
    %9 = tpu.matmul %8, %3, %cst_10 {dimension_numbers = #tpu.dot_dimension_numbers<[1], [0], [0], [1], [0, 0, 1, 1], [], []>} : vector<256x128xf32>, vector<128x128xf32>, vector<256x128xf32> -> vector<256x128xf32>
    %10 = vector.shape_cast %9 : vector<256x128xf32> to vector<32x8x128xf32>
    %11 = vector.shape_cast %7 : vector<32x128xf32> to vector<32x1x128xf32>
    %12 = vector.broadcast %11 : vector<32x1x128xf32> to vector<32x8x128xf32>
    %13 = arith.addf %10, %12 : vector<32x8x128xf32>
    %14 = math.tanh %13 : vector<32x8x128xf32>
    %c0_11 = arith.constant 0 : index
    %c0_12 = arith.constant 0 : index
    %15 = vector.load %arg6[%c0_11, %c0_12] : memref<1x128xf32, #tpu.memory_space<vmem>>, vector<1x128xf32>
    %16 = vector.shape_cast %15 : vector<1x128xf32> to vector<1x1x128xf32>
    %17 = vector.broadcast %16 : vector<1x1x128xf32> to vector<32x8x128xf32>
    %18 = arith.mulf %14, %17 : vector<32x8x128xf32>
    %cst_13 = arith.constant dense<0.000000e+00> : vector<32x8xf32>
    %19 = vector.multi_reduction <add>, %18, %cst_13 [2] : vector<32x8x128xf32> to vector<32x8xf32>
    %c0_14 = arith.constant 0 : index
    %20 = memref.load %arg7[%c0_14] : memref<1xf32, #tpu.memory_space<smem>>
    %21 = vector.broadcast %20 : f32 to vector<32x8xf32>
    %22 = arith.addf %19, %21 : vector<32x8xf32>
    %cst_15 = arith.constant dense<0xFF800000> : vector<32xf32>
    %23 = vector.multi_reduction <maximumf>, %22, %cst_15 [1] : vector<32x8xf32> to vector<32xf32>
    %24 = vector.shape_cast %23 : vector<32xf32> to vector<32x1xf32>
    %25 = vector.broadcast %24 : vector<32x1xf32> to vector<32x8xf32>
    %26 = arith.subf %22, %25 : vector<32x8xf32>
    %27 = math.exp %26 : vector<32x8xf32>
    %cst_16 = arith.constant dense<0.000000e+00> : vector<32xf32>
    %28 = vector.multi_reduction <add>, %27, %cst_16 [1] : vector<32x8xf32> to vector<32xf32>
    %29 = vector.shape_cast %28 : vector<32xf32> to vector<32x1xf32>
    %30 = vector.broadcast %29 : vector<32x1xf32> to vector<32x8xf32>
    %31 = arith.divf %27, %30 : vector<32x8xf32>
    %32 = vector.shape_cast %31 : vector<32x8xf32> to vector<32x8x1xf32>
    %33 = vector.broadcast %32 : vector<32x8x1xf32> to vector<32x8x128xf32>
    %34 = arith.mulf %0, %33 : vector<32x8x128xf32>
    %cst_17 = arith.constant dense<0.000000e+00> : vector<32x128xf32>
    %35 = vector.multi_reduction <add>, %34, %cst_17 [1] : vector<32x8x128xf32> to vector<32x128xf32>
    %c0_18 = arith.constant 0 : index
    %c0_19 = arith.constant 0 : index
    %36 = vector.load %arg8[%c0_18, %c0_19] : memref<32x128xf32, #tpu.memory_space<vmem>>, vector<32x128xf32>
    tpu.vector_store %arg8[%c0_18, %c0_19], %35 {strides = array<i32>} : memref<32x128xf32, #tpu.memory_space<vmem>>, vector<32x128xf32>,
    %c0_20 = arith.constant 0 : index
    %c0_21 = arith.constant 0 : index
    %37 = vector.load %arg9[%c0_20, %c0_21] : memref<32x8xf32, #tpu.memory_space<vmem>>, vector<32x8xf32>
    tpu.vector_store %arg9[%c0_20, %c0_21], %31 {strides = array<i32>} : memref<32x8xf32, #tpu.memory_space<vmem>>, vector<32x8xf32>,
    return
  }
  func.func @transform_0(%arg0: i32) -> (i32, i32, i32) {
    %c0_i32 = arith.constant 0 : i32
    %c0_i32_0 = arith.constant 0 : i32
    %c0_i32_1 = arith.constant 0 : i32
    return %arg0, %c0_i32, %c0_i32_0 : i32, i32, i32
  }
  func.func @transform_1(%arg0: i32) -> (i32, i32) {
    %c0_i32 = arith.constant 0 : i32
    %c0_i32_0 = arith.constant 0 : i32
    return %arg0, %c0_i32 : i32, i32
  }
  func.func @transform_2(%arg0: i32) -> (i32, i32) {
    %c0_i32 = arith.constant 0 : i32
    %c0_i32_0 = arith.constant 0 : i32
    %c0_i32_1 = arith.constant 0 : i32
    return %c0_i32, %c0_i32_0 : i32, i32
  }
  func.func @transform_3(%arg0: i32) -> (i32, i32) {
    %c0_i32 = arith.constant 0 : i32
    %c0_i32_0 = arith.constant 0 : i32
    %c0_i32_1 = arith.constant 0 : i32
    return %c0_i32, %c0_i32_0 : i32, i32
  }
  func.func @transform_4(%arg0: i32) -> (i32, i32) {
    %c0_i32 = arith.constant 0 : i32
    %c0_i32_0 = arith.constant 0 : i32
    %c0_i32_1 = arith.constant 0 : i32
    return %c0_i32, %c0_i32_0 : i32, i32
  }
  func.func @transform_5(%arg0: i32) -> (i32, i32) {
    %c0_i32 = arith.constant 0 : i32
    %c0_i32_0 = arith.constant 0 : i32
    %c0_i32_1 = arith.constant 0 : i32
    return %c0_i32, %c0_i32_0 : i32, i32
  }
  func.func @transform_6(%arg0: i32) -> i32 {
    %c0_i32 = arith.constant 0 : i32
    %c0_i32_0 = arith.constant 0 : i32
    return %c0_i32 : i32
  }
  func.func @transform_7(%arg0: i32) -> (i32, i32) {
    %c0_i32 = arith.constant 0 : i32
    %c0_i32_0 = arith.constant 0 : i32
    return %arg0, %c0_i32 : i32, i32
  }
  func.func @transform_8(%arg0: i32) -> (i32, i32) {
    %c0_i32 = arith.constant 0 : i32
    %c0_i32_0 = arith.constant 0 : i32
    return %arg0, %c0_i32 : i32, i32
  }
}

</mosaic_0001>

<llo_original>
// kernel: tpu_custom_call.1
$region0: #{tpu_custom_call.1}
  #allocation0 [shape = 'u32[]', space=smem, size = 0x4, offset = 0x4, fixed_abs, tag = 'smem constant byte address 0x4 - core index']
  #allocation1 [shape = 'u32[144,128]{1,0:T(1,128)}', space=vmem, size = 0x12000, scoped, tag = 'internal scratch']
  #allocation2 [shape = 'f32[1]{0:T(128)S(6)}', space=smem, size = 0x200, scoped, tag = 'scoped memory for tpu_custom_call.1']
  %s0 = inlined_call_operand.hbm [shape: f32[64,8,128], index: 0, kind: input, shape index: {}]
  %s1 = inlined_call_operand.hbm [shape: f32[64,128], index: 1, kind: input, shape index: {}]
  %s2 = inlined_call_operand.hbm [shape: f32[128,128], index: 2, kind: input, shape index: {}]
  %s3 = inlined_call_operand.vmem [shape: f32[1,128], index: 3, kind: input, shape index: {}]
  %s4 = inlined_call_operand.hbm [shape: f32[128,128], index: 4, kind: input, shape index: {}]
  %s5 = inlined_call_operand.vmem [shape: f32[1,128], index: 5, kind: input, shape index: {}]
  %s6 = inlined_call_operand.<no memory space> [shape: f32[1], index: 6, kind: input, shape index: {}]
  %s7 = inlined_call_operand.hbm [shape: f32[64,128], index: 7, kind: output, shape index: {0}]
  %s8 = inlined_call_operand.vmem [shape: f32[64,8], index: 8, kind: output, shape index: {1}]
  %9 = xla_tuple %s7, %s8
  %s10 = sld [smem:[#allocation0]]
  $region85: #{tpu_custom_call.1} parent=0
    _
  %s12 = ssub.s32 1, %s10
  %s13 = scalar_select 0, %s12, %s10
  %14 = sst [smem:[#allocation2]] %s6
  $region1: #{tpu_custom_call.1} parent=0
    #allocation3 [shape = 'u8[262144]{0}', space=vmem, size = 0x40000, scoped, tag = 'input window, operand 0']
    #allocation4 [shape = 's32[2]{0}', space=sflag, size = 0x8, scoped, tag = 'scoped memory for tpu_custom_call.1']
    #allocation5 [shape = 's32[2]{0}', space=sflag, size = 0x8, scoped, tag = 'scoped memory for tpu_custom_call.1']
    #allocation6 [shape = 'u8[32768]{0}', space=vmem, size = 0x8000, scoped, tag = 'input window, operand 1']
    #allocation7 [shape = 's32[2]{0}', space=sflag, size = 0x8, scoped, tag = 'scoped memory for tpu_custom_call.1']
    #allocation8 [shape = 'u8[65536]{0}', space=vmem, size = 0x10000, scoped, tag = 'input window, operand 2, single buffered']
    #allocation9 [shape = 'u8[65536]{0}', space=vmem, size = 0x10000, scoped, tag = 'input window, operand 4, single buffered']
    #allocation10 [shape = 's32[1]{0}', space=sflag, size = 0x4, scoped, tag = 'scoped memory for tpu_custom_call.1']
    #allocation11 [shape = 'u8[32768]{0}', space=vmem, size = 0x8000, scoped, tag = 'output window, operand 0']
    %15 = vsyncpa [#allocation4], 0
    %s16 = scalar_lea.sflag [#allocation4], 1
    %17 = vsyncpa %s16, 0
    %18 = vsyncpa [#allocation7], 0
    %s19 = scalar_lea.sflag [#allocation7], 1
    %20 = vsyncpa %s19, 0
    %21 = vsyncpa [#allocation10], 0
    %22 = vsyncpa [#allocation5], 0
    %s23 = scalar_lea.sflag [#allocation5], 1
    %24 = vsyncpa %s23, 0
    loop: start=0, step=1, limit=4
    $region2: #{tpu_custom_call.1} parent=1 // loop_pre_header
      _
    $region3: #{tpu_custom_call.1} parent=1 // loop_header
      %s26 = sphi 0, %s30
      %p27 = scmp.ge.s32.totalorder %s26, 4
      %s36 = sphi 0, %s38
      %s39 = sphi 0, %s36
      %s40 = sphi 0, %s39
      %s56 = sphi 0, %s40
      %s62 = sphi 0, %s64
      %s65 = sphi 0, %s62
      %s66 = sphi 0, %s65
      %s82 = sphi 0, %s66
      %s86 = sphi 0, %s86
      %s88 = sphi 0, %s86
      %s89 = sphi 0, %s88
      %s103 = sphi 0, %s89
      %s107 = sphi 0, %s107
      %s109 = sphi 0, %s107
      %s110 = sphi 0, %s109
      %s124 = sphi 0, %s110
      %s128 = sphi 0, %s128
      %s130 = sphi 0, %s128
      %s131 = sphi 0, %s130
      %s145 = sphi 0, %s131
      %s149 = sphi 0, %s149
      %s151 = sphi 0, %s149
      %s152 = sphi 0, %s151
      %s166 = sphi 0, %s152
      %s170 = sphi 0, %s170
      %s172 = sphi 0, %s170
      %s173 = sphi 0, %s172
      %s187 = sphi 0, %s173
      %s193 = sphi 0, %s195
      %s196 = sphi 0, %s193
      %s197 = sphi 0, %s196
      %s213 = sphi 0, %s197
      %s219 = sphi 0, %s221
      %s222 = sphi 0, %s219
      %s223 = sphi 0, %s222
      %s239 = sphi 0, %s223
    $region4: #{tpu_custom_call.1} parent=1 // loop_header_branch
      %29 = sbr.rel (%p27) target = $region8
    $region5: #{tpu_custom_call.1} parent=1 // loop_body
      %s31 = ssub.s32 %s26, 1
      %s32 = ssub.s32 %s26, 2
      %s33 = sadd.s32 %s26, 1
      %s34 = ssub.s32 %s26, %s33
      %p35 = scmp.eq.s32.totalorder %s34, 0
      %s37 = sadd.s32 %s36, 1
      %s38 = scalar_select %p35, %s36, %s37
      %p41 = pneg %p35
      %p42 = scmp.eq.s32.totalorder %s26, 1
      %p43 = por %p41, %p42
      %p44 = scmp.ne.s32.totalorder %s36, %s39
      %p45 = scmp.eq.s32.totalorder %s26, 0
      %p46 = por %p44, %p45
      %p47 = scmp.ne.s32.totalorder %s36, %s39
      %p48 = scmp.eq.s32.totalorder %s31, 1
      %p49 = por %p47, %p48
      %p50 = scmp.ne.s32.totalorder %s39, %s40
      %p51 = scmp.eq.s32.totalorder %s31, 0
      %p52 = por %p50, %p51
      %p53 = scmp.ne.s32.totalorder %s39, %s40
      %p54 = scmp.eq.s32.totalorder %s32, 1
      %p55 = por %p53, %p54
      %p57 = scmp.ne.s32.totalorder %s40, %s56
      %p58 = scmp.eq.s32.totalorder %s32, 0
      %p59 = por %p57, %p58
      %s60 = ssub.s32 %s26, %s33
      %p61 = scmp.eq.s32.totalorder %s60, 0
      %s63 = sadd.s32 %s62, 1
      %s64 = scalar_select %p61, %s62, %s63
      %p67 = pneg %p61
      %p68 = scmp.eq.s32.totalorder %s26, 1
      %p69 = por %p67, %p68
      %p70 = scmp.ne.s32.totalorder %s62, %s65
      %p71 = scmp.eq.s32.totalorder %s26, 0
      %p72 = por %p70, %p71
      %p73 = scmp.ne.s32.totalorder %s62, %s65
      %p74 = scmp.eq.s32.totalorder %s31, 1
      %p75 = por %p73, %p74
      %p76 = scmp.ne.s32.totalorder %s65, %s66
      %p77 = scmp.eq.s32.totalorder %s31, 0
      %p78 = por %p76, %p77
      %p79 = scmp.ne.s32.totalorder %s65, %s66
      %p80 = scmp.eq.s32.totalorder %s32, 1
      %p81 = por %p79, %p80
      %p83 = scmp.ne.s32.totalorder %s66, %s82
      %p84 = scmp.eq.s32.totalorder %s32, 0
      %p85 = por %p83, %p84
      %s87 = sadd.s32 %s86, 1
      %p90 = scmp.eq.s32.totalorder %s26, 1
      %p91 = scmp.ne.s32.totalorder %s86, %s88
      %p92 = scmp.eq.s32.totalorder %s26, 0
      %p93 = por %p91, %p92
      %p94 = scmp.ne.s32.totalorder %s86, %s88
      %p95 = scmp.eq.s32.totalorder %s31, 1
      %p96 = por %p94, %p95
      %p97 = scmp.ne.s32.totalorder %s88, %s89
      %p98 = scmp.eq.s32.totalorder %s31, 0
      %p99 = por %p97, %p98
      %p100 = scmp.ne.s32.totalorder %s88, %s89
      %p101 = scmp.eq.s32.totalorder %s32, 1
      %p102 = por %p100, %p101
      %p104 = scmp.ne.s32.totalorder %s89, %s103
      %p105 = scmp.eq.s32.totalorder %s32, 0
      %p106 = por %p104, %p105
      %s108 = sadd.s32 %s107, 1
      %p111 = scmp.eq.s32.totalorder %s26, 1
      %p112 = scmp.ne.s32.totalorder %s107, %s109
      %p113 = scmp.eq.s32.totalorder %s26, 0
      %p114 = por %p112, %p113
      %p115 = scmp.ne.s32.totalorder %s107, %s109
      %p116 = scmp.eq.s32.totalorder %s31, 1
      %p117 = por %p115, %p116
      %p118 = scmp.ne.s32.totalorder %s109, %s110
      %p119 = scmp.eq.s32.totalorder %s31, 0
      %p120 = por %p118, %p119
      %p121 = scmp.ne.s32.totalorder %s109, %s110
      %p122 = scmp.eq.s32.totalorder %s32, 1
      %p123 = por %p121, %p122
      %p125 = scmp.ne.s32.totalorder %s110, %s124
      %p126 = scmp.eq.s32.totalorder %s32, 0
      %p127 = por %p125, %p126
      %s129 = sadd.s32 %s128, 1
      %p132 = scmp.eq.s32.totalorder %s26, 1
      %p133 = scmp.ne.s32.totalorder %s128, %s130
      %p134 = scmp.eq.s32.totalorder %s26, 0
      %p135 = por %p133, %p134
      %p136 = scmp.ne.s32.totalorder %s128, %s130
      %p137 = scmp.eq.s32.totalorder %s31, 1
      %p138 = por %p136, %p137
      %p139 = scmp.ne.s32.totalorder %s130, %s131
      %p140 = scmp.eq.s32.totalorder %s31, 0
      %p141 = por %p139, %p140
      %p142 = scmp.ne.s32.totalorder %s130, %s131
      %p143 = scmp.eq.s32.totalorder %s32, 1
      %p144 = por %p142, %p143
      %p146 = scmp.ne.s32.totalorder %s131, %s145
      %p147 = scmp.eq.s32.totalorder %s32, 0
      %p148 = por %p146, %p147
      %s150 = sadd.s32 %s149, 1
      %p153 = scmp.eq.s32.totalorder %s26, 1
      %p154 = scmp.ne.s32.totalorder %s149, %s151
      %p155 = scmp.eq.s32.totalorder %s26, 0
      %p156 = por %p154, %p155
      %p157 = scmp.ne.s32.totalorder %s149, %s151
      %p158 = scmp.eq.s32.totalorder %s31, 1
      %p159 = por %p157, %p158
      %p160 = scmp.ne.s32.totalorder %s151, %s152
      %p161 = scmp.eq.s32.totalorder %s31, 0
      %p162 = por %p160, %p161
      %p163 = scmp.ne.s32.totalorder %s151, %s152
      %p164 = scmp.eq.s32.totalorder %s32, 1
      %p165 = por %p163, %p164
      %p167 = scmp.ne.s32.totalorder %s152, %s166
      %p168 = scmp.eq.s32.totalorder %s32, 0
      %p169 = por %p167, %p168
      %s171 = sadd.s32 %s170, 1
      %p174 = scmp.eq.s32.totalorder %s26, 1
      %p175 = scmp.ne.s32.totalorder %s170, %s172
      %p176 = scmp.eq.s32.totalorder %s26, 0
      %p177 = por %p175, %p176
      %p178 = scmp.ne.s32.totalorder %s170, %s172
      %p179 = scmp.eq.s32.totalorder %s31, 1
      %p180 = por %p178, %p179
      %p181 = scmp.ne.s32.totalorder %s172, %s173
      %p182 = scmp.eq.s32.totalorder %s31, 0
      %p183 = por %p181, %p182
      %p184 = scmp.ne.s32.totalorder %s172, %s173
      %p185 = scmp.eq.s32.totalorder %s32, 1
      %p186 = por %p184, %p185
      %p188 = scmp.ne.s32.totalorder %s173, %s187
      %p189 = scmp.eq.s32.totalorder %s32, 0
      %p190 = por %p188, %p189
      %s191 = ssub.s32 %s26, %s33
      %p192 = scmp.eq.s32.totalorder %s191, 0
      %s194 = sadd.s32 %s193, 1
      %s195 = scalar_select %p192, %s193, %s194
      %p198 = pneg %p192
      %p199 = scmp.eq.s32.totalorder %s26, 1
      %p200 = por %p198, %p199
      %p201 = scmp.ne.s32.totalorder %s193, %s196
      %p202 = scmp.eq.s32.totalorder %s26, 0
      %p203 = por %p201, %p202
      %p204 = scmp.ne.s32.totalorder %s193, %s196
      %p205 = scmp.eq.s32.totalorder %s31, 1
      %p206 = por %p204, %p205
      %p207 = scmp.ne.s32.totalorder %s196, %s197
      %p208 = scmp.eq.s32.totalorder %s31, 0
      %p209 = por %p207, %p208
      %p210 = scmp.ne.s32.totalorder %s196, %s197
      %p211 = scmp.eq.s32.totalorder %s32, 1
      %p212 = por %p210, %p211
      %p214 = scmp.ne.s32.totalorder %s197, %s213
      %p215 = scmp.eq.s32.totalorder %s32, 0
      %p216 = por %p214, %p215
      %s217 = ssub.s32 %s26, %s33
      %p218 = scmp.eq.s32.totalorder %s217, 0
      %s220 = sadd.s32 %s219, 1
      %s221 = scalar_select %p218, %s219, %s220
      %p224 = pneg %p218
      %p225 = scmp.eq.s32.totalorder %s26, 1
      %p226 = por %p224, %p225
      %p227 = scmp.ne.s32.totalorder %s219, %s222
      %p228 = scmp.eq.s32.totalorder %s26, 0
      %p229 = por %p227, %p228
      %p230 = scmp.ne.s32.totalorder %s219, %s222
      %p231 = scmp.eq.s32.totalorder %s31, 1
      %p232 = por %p230, %p231
      %p233 = scmp.ne.s32.totalorder %s222, %s223
      %p234 = scmp.eq.s32.totalorder %s31, 0
      %p235 = por %p233, %p234
      %p236 = scmp.ne.s32.totalorder %s222, %s223
      %p237 = scmp.eq.s32.totalorder %s32, 1
      %p238 = por %p236, %p237
      %p240 = scmp.ne.s32.totalorder %s223, %s239
      %p241 = scmp.eq.s32.totalorder %s32, 0
      %p242 = por %p240, %p241
      %p243 = scmp.le.s32.totalorder 1, %s26
      %p244 = scmp.lt.s32.totalorder %s26, 3
      %p245 = pnand %p243, %p244
      %p246 = pneg %p245
      // Predicated region
      $region9: #{tpu_custom_call.1} parent=5 // pred_check
        _
      $region10: #{tpu_custom_call.1} parent=5 // pred_check_branch
        %248 = sbr.rel (%p245) target = $region12
      $region11: #{tpu_custom_call.1} parent=5 // pred_region
        %s249 = ssub.s32 %s26, 1
        // Predicated region
        $region13: #{tpu_custom_call.1} parent=11 // pred_check
          %p250 = pneg %p99
        $region14: #{tpu_custom_call.1} parent=11 // pred_check_branch
          %252 = sbr.rel (%p250) target = $region16
        $region15: #{tpu_custom_call.1} parent=11 // pred_region
          %s254 = ssub.s32 2048, 2048
          %255 = vsyncadd [#allocation7], %s254
          %s256 = sshll.u32 [#allocation8], 4
          %s257 = int_to_ptr.vmem [resolvable:$true] %s256
          %262 = dma.hbm_to_vmem [thread:$0]  %s2, 2048, %s257, [#allocation7], 128, 128, 8
        $region16: #{tpu_custom_call.1} parent=11 // pred_fallthru
          _
        // Predicated region
        $region17: #{tpu_custom_call.1} parent=11 // pred_check
          %p263 = pneg %p120
        $region18: #{tpu_custom_call.1} parent=11 // pred_check_branch
          %265 = sbr.rel (%p263) target = $region20
        $region19: #{tpu_custom_call.1} parent=11 // pred_region
          _
        $region20: #{tpu_custom_call.1} parent=11 // pred_fallthru
          _
        // Predicated region
        $region21: #{tpu_custom_call.1} parent=11 // pred_check
          %p266 = pneg %p141
        $region22: #{tpu_custom_call.1} parent=11 // pred_check_branch
          %268 = sbr.rel (%p266) target = $region24
        $region23: #{tpu_custom_call.1} parent=11 // pred_region
          %s270 = ssub.s32 2048, 2048
          %271 = vsyncadd [#allocation10], %s270
          %s272 = sshll.u32 [#allocation9], 4
          %s273 = int_to_ptr.vmem [resolvable:$true] %s272
          %278 = dma.hbm_to_vmem [thread:$0]  %s4, 2048, %s273, [#allocation10], 128, 128, 8
        $region24: #{tpu_custom_call.1} parent=11 // pred_fallthru
          _
        // Predicated region
        $region25: #{tpu_custom_call.1} parent=11 // pred_check
          %p279 = pneg %p162
        $region26: #{tpu_custom_call.1} parent=11 // pred_check_branch
          %281 = sbr.rel (%p279) target = $region28
        $region27: #{tpu_custom_call.1} parent=11 // pred_region
          _
        $region28: #{tpu_custom_call.1} parent=11 // pred_fallthru
          _
        // Predicated region
        $region29: #{tpu_custom_call.1} parent=11 // pred_check
          %p282 = pneg %p183
        $region30: #{tpu_custom_call.1} parent=11 // pred_check_branch
          %284 = sbr.rel (%p282) target = $region32
        $region31: #{tpu_custom_call.1} parent=11 // pred_region
          _
        $region32: #{tpu_custom_call.1} parent=11 // pred_fallthru
          _
      $region12: #{tpu_custom_call.1} parent=5 // pred_fallthru
        _
      %p285 = scmp.lt.s32.totalorder %s26, 2
      // Predicated region
      $region33: #{tpu_custom_call.1} parent=5 // pred_check
        %p286 = pneg %p285
      $region34: #{tpu_custom_call.1} parent=5 // pred_check_branch
        %288 = sbr.rel (%p286) target = $region36
      $region35: #{tpu_custom_call.1} parent=5 // pred_region
        // Predicated region
        $region37: #{tpu_custom_call.1} parent=35 // pred_check
          %p289 = pneg %p46
        $region38: #{tpu_custom_call.1} parent=35 // pred_check_branch
          %291 = sbr.rel (%p289) target = $region40
        $region39: #{tpu_custom_call.1} parent=35 // pred_region
          %s292 = sand.u32 %s36, 1
          %s293 = scalar_lea.sflag [#allocation4], %s292
          %s294 = sand.u32 %s36, 1
          %s295 = smul.addr %s294, 256
          %s296 = scalar_lea.vmem [#allocation3], %s295
          %s297 = smul.u32 32, %s26
          %s299 = ssub.s32 4096, 4096
          %300 = vsyncadd %s293, %s299
          %s301 = smul.addr %s297, 128
          %s302 = scalar_lea.hbm %s0, %s301
          %s303 = sshll.u32 %s296, 4
          %s304 = int_to_ptr.vmem [resolvable:$true] %s303
          %309 = dma.hbm_to_vmem [thread:$0]  %s302, 4096, %s304, %s293, 128, 128, 8
        $region40: #{tpu_custom_call.1} parent=35 // pred_fallthru
          _
        // Predicated region
        $region41: #{tpu_custom_call.1} parent=35 // pred_check
          %p310 = pneg %p72
        $region42: #{tpu_custom_call.1} parent=35 // pred_check_branch
          %312 = sbr.rel (%p310) target = $region44
        $region43: #{tpu_custom_call.1} parent=35 // pred_region
          %s313 = sand.u32 %s26, 1
          %s314 = scalar_lea.sflag [#allocation7], %s313
          %s315 = sand.u32 %s62, 1
          %s316 = smul.addr %s315, 32
          %s317 = scalar_lea.vmem [#allocation6], %s316
          %s318 = smul.u32 4, %s26
          %s320 = ssub.s32 512, 512
          %321 = vsyncadd %s314, %s320
          %s322 = smul.addr %s318, 128
          %s323 = scalar_lea.hbm %s1, %s322
          %s324 = sshll.u32 %s317, 4
          %s325 = int_to_ptr.vmem [resolvable:$true] %s324
          %330 = dma.hbm_to_vmem [thread:$0]  %s323, 512, %s325, %s314, 128, 128, 8
        $region44: #{tpu_custom_call.1} parent=35 // pred_fallthru
          _
      $region36: #{tpu_custom_call.1} parent=5 // pred_fallthru
        _
      %p331 = scmp.le.s32.totalorder 1, %s26
      %p332 = scmp.lt.s32.totalorder %s26, 3
      %p333 = pnand %p331, %p332
      %p334 = pneg %p333
      // Predicated region
      $region45: #{tpu_custom_call.1} parent=5 // pred_check
        _
      $region46: #{tpu_custom_call.1} parent=5 // pred_check_branch
        %336 = sbr.rel (%p333) target = $region48
      $region47: #{tpu_custom_call.1} parent=5 // pred_region
        %s337 = ssub.s32 %s26, 1
        %s338 = sand.u32 %s39, 1
        %s339 = scalar_lea.sflag [#allocation4], %s338
        %s340 = sand.u32 %s39, 1
        %s341 = smul.addr %s340, 256
        %s342 = scalar_lea.vmem [#allocation3], %s341
        // Predicated region
        $region49: #{tpu_custom_call.1} parent=47 // pred_check
          %p343 = pneg %p52
        $region50: #{tpu_custom_call.1} parent=47 // pred_check_branch
          %345 = sbr.rel (%p343) target = $region52
        $region51: #{tpu_custom_call.1} parent=47 // pred_region
          %346 = dma.done %s339, 4096
        $region52: #{tpu_custom_call.1} parent=47 // pred_fallthru
          _
        %s347 = sand.u32 %s31, 1
        %s348 = scalar_lea.sflag [#allocation7], %s347
        %s349 = sand.u32 %s65, 1
        %s350 = smul.addr %s349, 32
        %s351 = scalar_lea.vmem [#allocation6], %s350
        // Predicated region
        $region53: #{tpu_custom_call.1} parent=47 // pred_check
          %p352 = pneg %p78
        $region54: #{tpu_custom_call.1} parent=47 // pred_check_branch
          %354 = sbr.rel (%p352) target = $region56
        $region55: #{tpu_custom_call.1} parent=47 // pred_region
          %355 = dma.done %s348, 512
        $region56: #{tpu_custom_call.1} parent=47 // pred_fallthru
          _
        // Predicated region
        $region57: #{tpu_custom_call.1} parent=47 // pred_check
          %p356 = pneg %p99
        $region58: #{tpu_custom_call.1} parent=47 // pred_check_branch
          %358 = sbr.rel (%p356) target = $region60
        $region59: #{tpu_custom_call.1} parent=47 // pred_region
          %359 = dma.done [#allocation7], 2048
        $region60: #{tpu_custom_call.1} parent=47 // pred_fallthru
          _
        // Predicated region
        $region61: #{tpu_custom_call.1} parent=47 // pred_check
          %p360 = pneg %p141
        $region62: #{tpu_custom_call.1} parent=47 // pred_check_branch
          %362 = sbr.rel (%p360) target = $region64
        $region63: #{tpu_custom_call.1} parent=47 // pred_region
          %363 = dma.done [#allocation10], 2048
        $region64: #{tpu_custom_call.1} parent=47 // pred_fallthru
          _
        %s364 = sand.u32 %s39, 1
        %s365 = scalar_lea.sflag [#allocation4], %s364
        %s366 = sand.u32 %s39, 1
        %s367 = smul.addr %s366, 256
        %s368 = scalar_lea.vmem [#allocation3], %s367
        %p369 = pneg %p52
        %p370 = pneg %p49
        %s371 = sand.u32 %s31, 1
        %s372 = scalar_lea.sflag [#allocation7], %s371
        %s373 = sand.u32 %s65, 1
        %s374 = smul.addr %s373, 32
        %s375 = scalar_lea.vmem [#allocation6], %s374
        %p376 = pneg %p78
        %p377 = pneg %p75
        %p378 = pneg %p99
        %p379 = pneg %p96
        %p380 = pneg %p120
        %p381 = pneg %p117
        %p382 = pneg %p141
        %p383 = pneg %p138
        %p384 = pneg %p162
        %p385 = pneg %p159
        %p386 = pneg %p183
        %p387 = pneg %p180
        %p388 = pneg %p209
        %p389 = pneg %p206
        %s390 = sand.u32 %s196, 1
        %s391 = scalar_lea.sflag [#allocation5], %s390
        %s392 = sand.u32 %s196, 1
        %s393 = smul.addr %s392, 32
        %s394 = scalar_lea.vmem [#allocation11], %s393
        %p395 = pneg %p235
        %p396 = pneg %p232
        %s397 = smul.u32 4, %s31
        %p398 = scmp.lt.s32.totalorder %s397, 7
        %s399 = scalar_select %p398, %s397, 7
        %s400 = smul.addr %s399, 8
        %s401 = scalar_lea.vmem %s8, %s400
        %s402 = smul.u32 32, %s31
        %s403 = smul.u32 4, %s31
        %s404 = smul.u32 4, %s31
        %s405 = smul.u32 4, %s31
        %p406 = scmp.lt.s32.totalorder %s405, 7
        %s407 = scalar_select %p406, %s405, 7
        %s408 = smul.addr %s407, 8
        %s409 = scalar_lea.vmem %s8, %s408
        %s410 = smul.u32 4, %s31
        %v411 = vld [vmem:[%s342] sm:$0xff]
        %v412 = vld [vmem:[%s342 + $0x8] sm:$0xff]
        %v413 = vld [vmem:[%s342 + $0x10] sm:$0xff]
        %v414 = vld [vmem:[%s342 + $0x18] sm:$0xff]
        %v415 = vld [vmem:[%s342 + $0x20] sm:$0xff]
        %v416 = vld [vmem:[%s342 + $0x28] sm:$0xff]
        %v417 = vld [vmem:[%s342 + $0x30] sm:$0xff]
        %v418 = vld [vmem:[%s342 + $0x38] sm:$0xff]
        %v419 = vld [vmem:[%s342 + $0x40] sm:$0xff]
        %v420 = vld [vmem:[%s342 + $0x48] sm:$0xff]
        %v421 = vld [vmem:[%s342 + $0x50] sm:$0xff]
        %v422 = vld [vmem:[%s342 + $0x58] sm:$0xff]
        %v423 = vld [vmem:[%s342 + $0x60] sm:$0xff]
        %v424 = vld [vmem:[%s342 + $0x68] sm:$0xff]
        %v425 = vld [vmem:[%s342 + $0x70] sm:$0xff]
        %v426 = vld [vmem:[%s342 + $0x78] sm:$0xff]
        %v427 = vld [vmem:[%s342 + $0x80] sm:$0xff]
        %v428 = vld [vmem:[%s342 + $0x88] sm:$0xff]
        %v429 = vld [vmem:[%s342 + $0x90] sm:$0xff]
        %v430 = vld [vmem:[%s342 + $0x98] sm:$0xff]
        %v431 = vld [vmem:[%s342 + $0xa0] sm:$0xff]
        %v432 = vld [vmem:[%s342 + $0xa8] sm:$0xff]
        %v433 = vld [vmem:[%s342 + $0xb0] sm:$0xff]
        %v434 = vld [vmem:[%s342 + $0xb8] sm:$0xff]
        %v435 = vld [vmem:[%s342 + $0xc0] sm:$0xff]
        %v436 = vld [vmem:[%s342 + $0xc8] sm:$0xff]
        %v437 = vld [vmem:[%s342 + $0xd0] sm:$0xff]
        %v438 = vld [vmem:[%s342 + $0xd8] sm:$0xff]
        %v439 = vld [vmem:[%s342 + $0xe0] sm:$0xff]
        %v440 = vld [vmem:[%s342 + $0xe8] sm:$0xff]
        %v441 = vld [vmem:[%s342 + $0xf0] sm:$0xff]
        %v442 = vld [vmem:[%s342 + $0xf8] sm:$0xff]
        %v443 = vld [vmem:[%s351] sm:$0xff]
        %v444 = vld [vmem:[%s351 + $0x8] sm:$0xff]
        %v445 = vld [vmem:[%s351 + $0x10] sm:$0xff]
        %v446 = vld [vmem:[%s351 + $0x18] sm:$0xff]
        %v447 = vld [vmem:[#allocation8] sm:$0xff]
        %v448 = vld [vmem:[#allocation8 + $0x8] sm:$0xff]
        %v449 = vld [vmem:[#allocation8 + $0x10] sm:$0xff]
        %v450 = vld [vmem:[#allocation8 + $0x18] sm:$0xff]
        %v451 = vld [vmem:[#allocation8 + $0x20] sm:$0xff]
        %v452 = vld [vmem:[#allocation8 + $0x28] sm:$0xff]
        %v453 = vld [vmem:[#allocation8 + $0x30] sm:$0xff]
        %v454 = vld [vmem:[#allocation8 + $0x38] sm:$0xff]
        %v455 = vld [vmem:[#allocation8 + $0x40] sm:$0xff]
        %v456 = vld [vmem:[#allocation8 + $0x48] sm:$0xff]
        %v457 = vld [vmem:[#allocation8 + $0x50] sm:$0xff]
        %v458 = vld [vmem:[#allocation8 + $0x58] sm:$0xff]
        %v459 = vld [vmem:[#allocation8 + $0x60] sm:$0xff]
        %v460 = vld [vmem:[#allocation8 + $0x68] sm:$0xff]
        %v461 = vld [vmem:[#allocation8 + $0x70] sm:$0xff]
        %v462 = vld [vmem:[#allocation8 + $0x78] sm:$0xff]
        %v463 = vld [vmem:[#allocation9] sm:$0xff]
        %v464 = vld [vmem:[#allocation9 + $0x8] sm:$0xff]
        %v465 = vld [vmem:[#allocation9 + $0x10] sm:$0xff]
        %v466 = vld [vmem:[#allocation9 + $0x18] sm:$0xff]
        %v467 = vld [vmem:[#allocation9 + $0x20] sm:$0xff]
        %v468 = vld [vmem:[#allocation9 + $0x28] sm:$0xff]
        %v469 = vld [vmem:[#allocation9 + $0x30] sm:$0xff]
        %v470 = vld [vmem:[#allocation9 + $0x38] sm:$0xff]
        %v471 = vld [vmem:[#allocation9 + $0x40] sm:$0xff]
        %v472 = vld [vmem:[#allocation9 + $0x48] sm:$0xff]
        %v473 = vld [vmem:[#allocation9 + $0x50] sm:$0xff]
        %v474 = vld [vmem:[#allocation9 + $0x58] sm:$0xff]
        %v475 = vld [vmem:[#allocation9 + $0x60] sm:$0xff]
        %v476 = vld [vmem:[#allocation9 + $0x68] sm:$0xff]
        %v477 = vld [vmem:[#allocation9 + $0x70] sm:$0xff]
        %v478 = vld [vmem:[#allocation9 + $0x78] sm:$0xff]
        %v479 = vld [vmem:[%s3] sm:$0x1]
        %v481 = vlaneseq
        %v482 = vshrl.u32 %v481, 7
        %v483 = vsub.s32 0, %v482
        %v484 = vrot.slane %v479, %v483
        %486 = vmatprep.subr.mxu0 0.0
        %487 = vmatpush1.msra.mxu0 %v447
        %488 = vmatprep.subr.mxu0 0.0
        %489 = vmatpush1.msra.mxu0 %v448
        %490 = vmatprep.subr.mxu0 0.0
        %491 = vmatpush1.msra.mxu0 %v449
        %492 = vmatprep.subr.mxu0 0.0
        %493 = vmatpush1.msra.mxu0 %v450
        %494 = vmatprep.subr.mxu0 0.0
        %495 = vmatpush1.msra.mxu0 %v451
        %496 = vmatprep.subr.mxu0 0.0
        %497 = vmatpush1.msra.mxu0 %v452
        %498 = vmatprep.subr.mxu0 0.0
        %499 = vmatpush1.msra.mxu0 %v453
        %500 = vmatprep.subr.mxu0 0.0
        %501 = vmatpush1.msra.mxu0 %v454
        %502 = vmatprep.subr.mxu0 0.0
        %503 = vmatpush1.msra.mxu0 %v455
        %504 = vmatprep.subr.mxu0 0.0
        %505 = vmatpush1.msra.mxu0 %v456
        %506 = vmatprep.subr.mxu0 0.0
        %507 = vmatpush1.msra.mxu0 %v457
        %508 = vmatprep.subr.mxu0 0.0
        %509 = vmatpush1.msra.mxu0 %v458
        %510 = vmatprep.subr.mxu0 0.0
        %511 = vmatpush1.msra.mxu0 %v459
        %512 = vmatprep.subr.mxu0 0.0
        %513 = vmatpush1.msra.mxu0 %v460
        %514 = vmatprep.subr.mxu0 0.0
        %515 = vmatpush1.msra.mxu0 %v461
        %516 = vmatprep.subr.mxu0 0.0
        %517 = vmatpush1.msra.mxu0 %v462
        %518 = vmatprep.subr.mxu0 0.0
        %519 = vmatpush1.msra.mxu0 0.0
        %520 = vmatprep.subr.mxu0 0.0
        %521 = vmatpush1.msra.mxu0 0.0
        %522 = vmatprep.subr.mxu0 0.0
        %523 = vmatpush1.msra.mxu0 0.0
        %524 = vmatprep.subr.mxu0 0.0
        %525 = vmatpush1.msra.mxu0 0.0
        %526 = vmatprep.subr.mxu0 0.0
        %527 = vmatpush1.msra.mxu0 0.0
        %528 = vmatprep.subr.mxu0 0.0
        %529 = vmatpush1.msra.mxu0 0.0
        %530 = vmatprep.subr.mxu0 0.0
        %531 = vmatpush1.msra.mxu0 0.0
        %532 = vmatprep.subr.mxu0 0.0
        %533 = vmatpush1.msra.mxu0 0.0
        %534 = vmatprep.subr.mxu0 0.0
        %535 = vmatpush1.msra.mxu0 0.0
        %536 = vmatprep.subr.mxu0 0.0
        %537 = vmatpush1.msra.mxu0 0.0
        %538 = vmatprep.subr.mxu0 0.0
        %539 = vmatpush1.msra.mxu0 0.0
        %540 = vmatprep.subr.mxu0 0.0
        %541 = vmatpush1.msra.mxu0 0.0
        %542 = vmatprep.subr.mxu0 0.0
        %543 = vmatpush1.msra.mxu0 0.0
        %544 = vmatprep.subr.mxu0 0.0
        %545 = vmatpush1.msra.mxu0 0.0
        %546 = vmatprep.subr.mxu0 0.0
        %547 = vmatpush1.msra.mxu0 0.0
        %548 = vmatprep.subr.mxu0 0.0
        %549 = vmatpush1.msra.mxu0 0.0
        %550 = vmatprep.mubr.f32.mxu0 0.0
        %551 = vmatmul.mubr.f32.gmra.mrb[0].mxu0 %v443
        %v552 = vpop.f32.mrb[0].mxu0
        %v553 = vadd.f32 %v484, %v552
        %v554 = vpop.f32.mrb[0].mxu0
        %555 = vmatprep.mubr.f32.mxu0 0.0
        %556 = vmatmul.mubr.f32.gmra.mrb[0].mxu0 %v444
        %v557 = vpop.f32.mrb[0].mxu0
        %v558 = vadd.f32 %v484, %v557
        %v559 = vpop.f32.mrb[0].mxu0
        %560 = vmatprep.mubr.f32.mxu0 0.0
        %561 = vmatmul.mubr.f32.gmra.mrb[0].mxu0 %v445
        %v562 = vpop.f32.mrb[0].mxu0
        %v563 = vadd.f32 %v484, %v562
        %v564 = vpop.f32.mrb[0].mxu0
        %565 = vmatprep.mubr.f32.mxu0 0.0
        %566 = vmatmul.mubr.f32.gmra.mrb[0].mxu0 %v446
        %v567 = vpop.f32.mrb[0].mxu0
        %v568 = vadd.f32 %v484, %v567
        %v569 = vpop.f32.mrb[0].mxu0
        %570 = vdwg.mxu0
        %571 = vmatprep.subr.mxu0 0.0
        %572 = vmatpush1.msra.mxu0 %v463
        %573 = vmatprep.subr.mxu0 0.0
        %574 = vmatpush1.msra.mxu0 %v464
        %575 = vmatprep.subr.mxu0 0.0
        %576 = vmatpush1.msra.mxu0 %v465
        %577 = vmatprep.subr.mxu0 0.0
        %578 = vmatpush1.msra.mxu0 %v466
        %579 = vmatprep.subr.mxu0 0.0
        %580 = vmatpush1.msra.mxu0 %v467
        %581 = vmatprep.subr.mxu0 0.0
        %582 = vmatpush1.msra.mxu0 %v468
        %583 = vmatprep.subr.mxu0 0.0
        %584 = vmatpush1.msra.mxu0 %v469
        %585 = vmatprep.subr.mxu0 0.0
        %586 = vmatpush1.msra.mxu0 %v470
        %587 = vmatprep.subr.mxu0 0.0
        %588 = vmatpush1.msra.mxu0 %v471
        %589 = vmatprep.subr.mxu0 0.0
        %590 = vmatpush1.msra.mxu0 %v472
        %591 = vmatprep.subr.mxu0 0.0
        %592 = vmatpush1.msra.mxu0 %v473
        %593 = vmatprep.subr.mxu0 0.0
        %594 = vmatpush1.msra.mxu0 %v474
        %595 = vmatprep.subr.mxu0 0.0
        %596 = vmatpush1.msra.mxu0 %v475
        %597 = vmatprep.subr.mxu0 0.0
        %598 = vmatpush1.msra.mxu0 %v476
        %599 = vmatprep.subr.mxu0 0.0
        %600 = vmatpush1.msra.mxu0 %v477
        %601 = vmatprep.subr.mxu0 0.0
        %602 = vmatpush1.msra.mxu0 %v478
        %603 = vmatprep.subr.mxu0 0.0
        %604 = vmatpush1.msra.mxu0 0.0
        %605 = vmatprep.subr.mxu0 0.0
        %606 = vmatpush1.msra.mxu0 0.0
        %607 = vmatprep.subr.mxu0 0.0
        %608 = vmatpush1.msra.mxu0 0.0
        %609 = vmatprep.subr.mxu0 0.0
        %610 = vmatpush1.msra.mxu0 0.0
        %611 = vmatprep.subr.mxu0 0.0
        %612 = vmatpush1.msra.mxu0 0.0
        %613 = vmatprep.subr.mxu0 0.0
        %614 = vmatpush1.msra.mxu0 0.0
        %615 = vmatprep.subr.mxu0 0.0
        %616 = vmatpush1.msra.mxu0 0.0
        %617 = vmatprep.subr.mxu0 0.0
        %618 = vmatpush1.msra.mxu0 0.0
        %619 = vmatprep.subr.mxu0 0.0
        %620 = vmatpush1.msra.mxu0 0.0
        %621 = vmatprep.subr.mxu0 0.0
        %622 = vmatpush1.msra.mxu0 0.0
        %623 = vmatprep.subr.mxu0 0.0
        %624 = vmatpush1.msra.mxu0 0.0
        %625 = vmatprep.subr.mxu0 0.0
        %626 = vmatpush1.msra.mxu0 0.0
        %627 = vmatprep.subr.mxu0 0.0
        %628 = vmatpush1.msra.mxu0 0.0
        %629 = vmatprep.subr.mxu0 0.0
        %630 = vmatpush1.msra.mxu0 0.0
        %631 = vmatprep.subr.mxu0 0.0
        %632 = vmatpush1.msra.mxu0 0.0
        %633 = vmatprep.subr.mxu0 0.0
        %634 = vmatpush1.msra.mxu0 0.0
        %635 = vmatprep.mubr.f32.mxu0 0.0
        %636 = vmatmul.mubr.f32.gmra.mrb[0].mxu0 %v411
        %v637 = vpop.f32.mrb[0].mxu0
        %v638 = vadd.f32 0.0, %v637
        %v639 = vpop.f32.mrb[0].mxu0
        %640 = vmatprep.mubr.f32.mxu0 0.0
        %641 = vmatmul.mubr.f32.gmra.mrb[0].mxu0 %v412
        %v642 = vpop.f32.mrb[0].mxu0
        %v643 = vadd.f32 0.0, %v642
        %v644 = vpop.f32.mrb[0].mxu0
        %645 = vmatprep.mubr.f32.mxu0 0.0
        %646 = vmatmul.mubr.f32.gmra.mrb[0].mxu0 %v413
        %v647 = vpop.f32.mrb[0].mxu0
        %v648 = vadd.f32 0.0, %v647
        %v649 = vpop.f32.mrb[0].mxu0
        %650 = vmatprep.mubr.f32.mxu0 0.0
        %651 = vmatmul.mubr.f32.gmra.mrb[0].mxu0 %v414
        %v652 = vpop.f32.mrb[0].mxu0
        %v653 = vadd.f32 0.0, %v652
        %v654 = vpop.f32.mrb[0].mxu0
        %655 = vmatprep.mubr.f32.mxu0 0.0
        %656 = vmatmul.mubr.f32.gmra.mrb[0].mxu0 %v415
        %v657 = vpop.f32.mrb[0].mxu0
        %v658 = vadd.f32 0.0, %v657
        %v659 = vpop.f32.mrb[0].mxu0
        %660 = vmatprep.mubr.f32.mxu0 0.0
        %661 = vmatmul.mubr.f32.gmra.mrb[0].mxu0 %v416
        %v662 = vpop.f32.mrb[0].mxu0
        %v663 = vadd.f32 0.0, %v662
        %v664 = vpop.f32.mrb[0].mxu0
        %665 = vmatprep.mubr.f32.mxu0 0.0
        %666 = vmatmul.mubr.f32.gmra.mrb[0].mxu0 %v417
        %v667 = vpop.f32.mrb[0].mxu0
        %v668 = vadd.f32 0.0, %v667
        %v669 = vpop.f32.mrb[0].mxu0
        %670 = vmatprep.mubr.f32.mxu0 0.0
        %671 = vmatmul.mubr.f32.gmra.mrb[0].mxu0 %v418
        %v672 = vpop.f32.mrb[0].mxu0
        %v673 = vadd.f32 0.0, %v672
        %v674 = vpop.f32.mrb[0].mxu0
        %675 = vmatprep.mubr.f32.mxu0 0.0
        %676 = vmatmul.mubr.f32.gmra.mrb[0].mxu0 %v419
        %v677 = vpop.f32.mrb[0].mxu0
        %v678 = vadd.f32 0.0, %v677
        %v679 = vpop.f32.mrb[0].mxu0
        %680 = vmatprep.mubr.f32.mxu0 0.0
        %681 = vmatmul.mubr.f32.gmra.mrb[0].mxu0 %v420
        %v682 = vpop.f32.mrb[0].mxu0
        %v683 = vadd.f32 0.0, %v682
        %v684 = vpop.f32.mrb[0].mxu0
        %685 = vmatprep.mubr.f32.mxu0 0.0
        %686 = vmatmul.mubr.f32.gmra.mrb[0].mxu0 %v421
        %v687 = vpop.f32.mrb[0].mxu0
        %v688 = vadd.f32 0.0, %v687
        %v689 = vpop.f32.mrb[0].mxu0
        %690 = vmatprep.mubr.f32.mxu0 0.0
        %691 = vmatmul.mubr.f32.gmra.mrb[0].mxu0 %v422
        %v692 = vpop.f32.mrb[0].mxu0
        %v693 = vadd.f32 0.0, %v692
        %v694 = vpop.f32.mrb[0].mxu0
        %695 = vmatprep.mubr.f32.mxu0 0.0
        %696 = vmatmul.mubr.f32.gmra.mrb[0].mxu0 %v423
        %v697 = vpop.f32.mrb[0].mxu0
        %v698 = vadd.f32 0.0, %v697
        %v699 = vpop.f32.mrb[0].mxu0
        %700 = vmatprep.mubr.f32.mxu0 0.0
        %701 = vmatmul.mubr.f32.gmra.mrb[0].mxu0 %v424
        %v702 = vpop.f32.mrb[0].mxu0
        %v703 = vadd.f32 0.0, %v702
        %v704 = vpop.f32.mrb[0].mxu0
        %705 = vmatprep.mubr.f32.mxu0 0.0
        %706 = vmatmul.mubr.f32.gmra.mrb[0].mxu0 %v425
        %v707 = vpop.f32.mrb[0].mxu0
        %v708 = vadd.f32 0.0, %v707
        %v709 = vpop.f32.mrb[0].mxu0
        %710 = vmatprep.mubr.f32.mxu0 0.0
        %711 = vmatmul.mubr.f32.gmra.mrb[0].mxu0 %v426
        %v712 = vpop.f32.mrb[0].mxu0
        %v713 = vadd.f32 0.0, %v712
        %v714 = vpop.f32.mrb[0].mxu0
        %715 = vmatprep.mubr.f32.mxu0 0.0
        %716 = vmatmul.mubr.f32.gmra.mrb[0].mxu0 %v427
        %v717 = vpop.f32.mrb[0].mxu0
        %v718 = vadd.f32 0.0, %v717
        %v719 = vpop.f32.mrb[0].mxu0
        %720 = vmatprep.mubr.f32.mxu0 0.0
        %721 = vmatmul.mubr.f32.gmra.mrb[0].mxu0 %v428
        %v722 = vpop.f32.mrb[0].mxu0
        %v723 = vadd.f32 0.0, %v722
        %v724 = vpop.f32.mrb[0].mxu0
        %725 = vmatprep.mubr.f32.mxu0 0.0
        %726 = vmatmul.mubr.f32.gmra.mrb[0].mxu0 %v429
        %v727 = vpop.f32.mrb[0].mxu0
        %v728 = vadd.f32 0.0, %v727
        %v729 = vpop.f32.mrb[0].mxu0
        %730 = vmatprep.mubr.f32.mxu0 0.0
        %731 = vmatmul.mubr.f32.gmra.mrb[0].mxu0 %v430
        %v732 = vpop.f32.mrb[0].mxu0
        %v733 = vadd.f32 0.0, %v732
        %v734 = vpop.f32.mrb[0].mxu0
        %735 = vmatprep.mubr.f32.mxu0 0.0
        %736 = vmatmul.mubr.f32.gmra.mrb[0].mxu0 %v431
        %v737 = vpop.f32.mrb[0].mxu0
        %v738 = vadd.f32 0.0, %v737
        %v739 = vpop.f32.mrb[0].mxu0
        %740 = vmatprep.mubr.f32.mxu0 0.0
        %741 = vmatmul.mubr.f32.gmra.mrb[0].mxu0 %v432
        %v742 = vpop.f32.mrb[0].mxu0
        %v743 = vadd.f32 0.0, %v742
        %v744 = vpop.f32.mrb[0].mxu0
        %745 = vmatprep.mubr.f32.mxu0 0.0
        %746 = vmatmul.mubr.f32.gmra.mrb[0].mxu0 %v433
        %v747 = vpop.f32.mrb[0].mxu0
        %v748 = vadd.f32 0.0, %v747
        %v749 = vpop.f32.mrb[0].mxu0
        %750 = vmatprep.mubr.f32.mxu0 0.0
        %751 = vmatmul.mubr.f32.gmra.mrb[0].mxu0 %v434
        %v752 = vpop.f32.mrb[0].mxu0
        %v753 = vadd.f32 0.0, %v752
        %v754 = vpop.f32.mrb[0].mxu0
        %755 = vmatprep.mubr.f32.mxu0 0.0
        %756 = vmatmul.mubr.f32.gmra.mrb[0].mxu0 %v435
        %v757 = vpop.f32.mrb[0].mxu0
        %v758 = vadd.f32 0.0, %v757
        %v759 = vpop.f32.mrb[0].mxu0
        %760 = vmatprep.mubr.f32.mxu0 0.0
        %761 = vmatmul.mubr.f32.gmra.mrb[0].mxu0 %v436
        %v762 = vpop.f32.mrb[0].mxu0
        %v763 = vadd.f32 0.0, %v762
        %v764 = vpop.f32.mrb[0].mxu0
        %765 = vmatprep.mubr.f32.mxu0 0.0
        %766 = vmatmul.mubr.f32.gmra.mrb[0].mxu0 %v437
        %v767 = vpop.f32.mrb[0].mxu0
        %v768 = vadd.f32 0.0, %v767
        %v769 = vpop.f32.mrb[0].mxu0
        %770 = vmatprep.mubr.f32.mxu0 0.0
        %771 = vmatmul.mubr.f32.gmra.mrb[0].mxu0 %v438
        %v772 = vpop.f32.mrb[0].mxu0
        %v773 = vadd.f32 0.0, %v772
        %v774 = vpop.f32.mrb[0].mxu0
        %775 = vmatprep.mubr.f32.mxu0 0.0
        %776 = vmatmul.mubr.f32.gmra.mrb[0].mxu0 %v439
        %v777 = vpop.f32.mrb[0].mxu0
        %v778 = vadd.f32 0.0, %v777
        %v779 = vpop.f32.mrb[0].mxu0
        %780 = vmatprep.mubr.f32.mxu0 0.0
        %781 = vmatmul.mubr.f32.gmra.mrb[0].mxu0 %v440
        %v782 = vpop.f32.mrb[0].mxu0
        %v783 = vadd.f32 0.0, %v782
        %v784 = vpop.f32.mrb[0].mxu0
        %785 = vmatprep.mubr.f32.mxu0 0.0
        %786 = vmatmul.mubr.f32.gmra.mrb[0].mxu0 %v441
        %v787 = vpop.f32.mrb[0].mxu0
        %v788 = vadd.f32 0.0, %v787
        %v789 = vpop.f32.mrb[0].mxu0
        %790 = vmatprep.mubr.f32.mxu0 0.0
        %791 = vmatmul.mubr.f32.gmra.mrb[0].mxu0 %v442
        %v792 = vpop.f32.mrb[0].mxu0
        %v793 = vadd.f32 0.0, %v792
        %v794 = vpop.f32.mrb[0].mxu0
        %795 = vdwg.mxu0
        %v800 = vcombine.high %v553, %v553
        %v802 = vunpack.c.l.s4 1966171168
        %v803 = vunpack.c.0.s8 %v802
        %v804 = vlaneseq
        %v805 = vshrl.u32 %v804, 7
        %v806 = vsub.s32 %v803, %v805
        %v807 = vrot.slane %v553, %v806
        %v809 = vunpack.c.l.s4 1966171168
        %v810 = vunpack.c.0.s8 %v809
        %v811 = vlaneseq
        %v812 = vshrl.u32 %v811, 7
        %v813 = vsub.s32 %v810, %v812
        %v814 = vrot.slane %v800, %v813
        %v815 = vcombine.high %v807, %v807
        %v816 = vcombine.high %v814, %v814
        %v818 = vunpack.c.l.s4 1966171168
        %v819 = vunpack.c.0.s8 %v818
        %v820 = vlaneseq
        %v821 = vshrl.u32 %v820, 7
        %v822 = vsub.s32 %v819, %v821
        %v823 = vrot.slane %v807, %v822
        %v825 = vunpack.c.l.s4 1966171168
        %v826 = vunpack.c.0.s8 %v825
        %v827 = vlaneseq
        %v828 = vshrl.u32 %v827, 7
        %v829 = vsub.s32 %v826, %v828
        %v830 = vrot.slane %v814, %v829
        %v832 = vunpack.c.l.s4 1966171168
        %v833 = vunpack.c.0.s8 %v832
        %v834 = vlaneseq
        %v835 = vshrl.u32 %v834, 7
        %v836 = vsub.s32 %v833, %v835
        %v837 = vrot.slane %v815, %v836
        %v839 = vunpack.c.l.s4 1966171168
        %v840 = vunpack.c.0.s8 %v839
        %v841 = vlaneseq
        %v842 = vshrl.u32 %v841, 7
        %v843 = vsub.s32 %v840, %v842
        %v844 = vrot.slane %v816, %v843
        %v845 = vcombine.high %v823, %v823
        %v846 = vcombine.high %v830, %v830
        %v847 = vcombine.high %v837, %v837
        %v848 = vcombine.high %v844, %v844
        %v849 = vcombine.high %v558, %v558
        %v851 = vunpack.c.l.s4 1966171168
        %v852 = vunpack.c.0.s8 %v851
        %v853 = vlaneseq
        %v854 = vshrl.u32 %v853, 7
        %v855 = vsub.s32 %v852, %v854
        %v856 = vrot.slane %v558, %v855
        %v858 = vunpack.c.l.s4 1966171168
        %v859 = vunpack.c.0.s8 %v858
        %v860 = vlaneseq
        %v861 = vshrl.u32 %v860, 7
        %v862 = vsub.s32 %v859, %v861
        %v863 = vrot.slane %v849, %v862
        %v864 = vcombine.high %v856, %v856
        %v865 = vcombine.high %v863, %v863
        %v867 = vunpack.c.l.s4 1966171168
        %v868 = vunpack.c.0.s8 %v867
        %v869 = vlaneseq
        %v870 = vshrl.u32 %v869, 7
        %v871 = vsub.s32 %v868, %v870
        %v872 = vrot.slane %v856, %v871
        %v874 = vunpack.c.l.s4 1966171168
        %v875 = vunpack.c.0.s8 %v874
        %v876 = vlaneseq
        %v877 = vshrl.u32 %v876, 7
        %v878 = vsub.s32 %v875, %v877
        %v879 = vrot.slane %v863, %v878
        %v881 = vunpack.c.l.s4 1966171168
        %v882 = vunpack.c.0.s8 %v881
        %v883 = vlaneseq
        %v884 = vshrl.u32 %v883, 7
        %v885 = vsub.s32 %v882, %v884
        %v886 = vrot.slane %v864, %v885
        %v888 = vunpack.c.l.s4 1966171168
        %v889 = vunpack.c.0.s8 %v888
        %v890 = vlaneseq
        %v891 = vshrl.u32 %v890, 7
        %v892 = vsub.s32 %v889, %v891
        %v893 = vrot.slane %v865, %v892
        %v894 = vcombine.high %v872, %v872
        %v895 = vcombine.high %v879, %v879
        %v896 = vcombine.high %v886, %v886
        %v897 = vcombine.high %v893, %v893
        %v898 = vcombine.high %v563, %v563
        %v900 = vunpack.c.l.s4 1966171168
        %v901 = vunpack.c.0.s8 %v900
        %v902 = vlaneseq
        %v903 = vshrl.u32 %v902, 7
        %v904 = vsub.s32 %v901, %v903
        %v905 = vrot.slane %v563, %v904
        %v907 = vunpack.c.l.s4 1966171168
        %v908 = vunpack.c.0.s8 %v907
        %v909 = vlaneseq
        %v910 = vshrl.u32 %v909, 7
        %v911 = vsub.s32 %v908, %v910
        %v912 = vrot.slane %v898, %v911
        %v913 = vcombine.high %v905, %v905
        %v914 = vcombine.high %v912, %v912
        %v916 = vunpack.c.l.s4 1966171168
        %v917 = vunpack.c.0.s8 %v916
        %v918 = vlaneseq
        %v919 = vshrl.u32 %v918, 7
        %v920 = vsub.s32 %v917, %v919
        %v921 = vrot.slane %v905, %v920
        %v923 = vunpack.c.l.s4 1966171168
        %v924 = vunpack.c.0.s8 %v923
        %v925 = vlaneseq
        %v926 = vshrl.u32 %v925, 7
        %v927 = vsub.s32 %v924, %v926
        %v928 = vrot.slane %v912, %v927
        %v930 = vunpack.c.l.s4 1966171168
        %v931 = vunpack.c.0.s8 %v930
        %v932 = vlaneseq
        %v933 = vshrl.u32 %v932, 7
        %v934 = vsub.s32 %v931, %v933
        %v935 = vrot.slane %v913, %v934
        %v937 = vunpack.c.l.s4 1966171168
        %v938 = vunpack.c.0.s8 %v937
        %v939 = vlaneseq
        %v940 = vshrl.u32 %v939, 7
        %v941 = vsub.s32 %v938, %v940
        %v942 = vrot.slane %v914, %v941
        %v943 = vcombine.high %v921, %v921
        %v944 = vcombine.high %v928, %v928
        %v945 = vcombine.high %v935, %v935
        %v946 = vcombine.high %v942, %v942
        %v947 = vcombine.high %v568, %v568
        %v949 = vunpack.c.l.s4 1966171168
        %v950 = vunpack.c.0.s8 %v949
        %v951 = vlaneseq
        %v952 = vshrl.u32 %v951, 7
        %v953 = vsub.s32 %v950, %v952
        %v954 = vrot.slane %v568, %v953
        %v956 = vunpack.c.l.s4 1966171168
        %v957 = vunpack.c.0.s8 %v956
        %v958 = vlaneseq
        %v959 = vshrl.u32 %v958, 7
        %v960 = vsub.s32 %v957, %v959
        %v961 = vrot.slane %v947, %v960
        %v962 = vcombine.high %v954, %v954
        %v963 = vcombine.high %v961, %v961
        %v965 = vunpack.c.l.s4 1966171168
        %v966 = vunpack.c.0.s8 %v965
        %v967 = vlaneseq
        %v968 = vshrl.u32 %v967, 7
        %v969 = vsub.s32 %v966, %v968
        %v970 = vrot.slane %v954, %v969
        %v972 = vunpack.c.l.s4 1966171168
        %v973 = vunpack.c.0.s8 %v972
        %v974 = vlaneseq
        %v975 = vshrl.u32 %v974, 7
        %v976 = vsub.s32 %v973, %v975
        %v977 = vrot.slane %v961, %v976
        %v979 = vunpack.c.l.s4 1966171168
        %v980 = vunpack.c.0.s8 %v979
        %v981 = vlaneseq
        %v982 = vshrl.u32 %v981, 7
        %v983 = vsub.s32 %v980, %v982
        %v984 = vrot.slane %v962, %v983
        %v986 = vunpack.c.l.s4 1966171168
        %v987 = vunpack.c.0.s8 %v986
        %v988 = vlaneseq
        %v989 = vshrl.u32 %v988, 7
        %v990 = vsub.s32 %v987, %v989
        %v991 = vrot.slane %v963, %v990
        %v992 = vcombine.high %v970, %v970
        %v993 = vcombine.high %v977, %v977
        %v994 = vcombine.high %v984, %v984
        %v995 = vcombine.high %v991, %v991
        %v996 = vlaneseq
        %v997 = vshrl.u32 %v996, 7
        %v998 = vsub.s32 0, %v997
        %v999 = vrot.slane %v823, %v998
        %v1000 = vlaneseq
        %v1001 = vshrl.u32 %v1000, 7
        %v1002 = vsub.s32 0, %v1001
        %v1003 = vrot.slane %v837, %v1002
        %v1004 = vlaneseq
        %v1005 = vshrl.u32 %v1004, 7
        %v1006 = vsub.s32 0, %v1005
        %v1007 = vrot.slane %v845, %v1006
        %v1008 = vlaneseq
        %v1009 = vshrl.u32 %v1008, 7
        %v1010 = vsub.s32 0, %v1009
        %v1011 = vrot.slane %v847, %v1010
        %v1012 = vlaneseq
        %v1013 = vshrl.u32 %v1012, 7
        %v1014 = vsub.s32 0, %v1013
        %v1015 = vrot.slane %v830, %v1014
        %v1016 = vlaneseq
        %v1017 = vshrl.u32 %v1016, 7
        %v1018 = vsub.s32 0, %v1017
        %v1019 = vrot.slane %v844, %v1018
        %v1020 = vlaneseq
        %v1021 = vshrl.u32 %v1020, 7
        %v1022 = vsub.s32 0, %v1021
        %v1023 = vrot.slane %v846, %v1022
        %v1024 = vlaneseq
        %v1025 = vshrl.u32 %v1024, 7
        %v1026 = vsub.s32 0, %v1025
        %v1027 = vrot.slane %v848, %v1026
        %v1028 = vlaneseq
        %v1029 = vshrl.u32 %v1028, 7
        %v1030 = vsub.s32 0, %v1029
        %v1031 = vrot.slane %v872, %v1030
        %v1032 = vlaneseq
        %v1033 = vshrl.u32 %v1032, 7
        %v1034 = vsub.s32 0, %v1033
        %v1035 = vrot.slane %v886, %v1034
        %v1036 = vlaneseq
        %v1037 = vshrl.u32 %v1036, 7
        %v1038 = vsub.s32 0, %v1037
        %v1039 = vrot.slane %v894, %v1038
        %v1040 = vlaneseq
        %v1041 = vshrl.u32 %v1040, 7
        %v1042 = vsub.s32 0, %v1041
        %v1043 = vrot.slane %v896, %v1042
        %v1044 = vlaneseq
        %v1045 = vshrl.u32 %v1044, 7
        %v1046 = vsub.s32 0, %v1045
        %v1047 = vrot.slane %v879, %v1046
        %v1048 = vlaneseq
        %v1049 = vshrl.u32 %v1048, 7
        %v1050 = vsub.s32 0, %v1049
        %v1051 = vrot.slane %v893, %v1050
        %v1052 = vlaneseq
        %v1053 = vshrl.u32 %v1052, 7
        %v1054 = vsub.s32 0, %v1053
        %v1055 = vrot.slane %v895, %v1054
        %v1056 = vlaneseq
        %v1057 = vshrl.u32 %v1056, 7
        %v1058 = vsub.s32 0, %v1057
        %v1059 = vrot.slane %v897, %v1058
        %v1060 = vlaneseq
        %v1061 = vshrl.u32 %v1060, 7
        %v1062 = vsub.s32 0, %v1061
        %v1063 = vrot.slane %v921, %v1062
        %v1064 = vlaneseq
        %v1065 = vshrl.u32 %v1064, 7
        %v1066 = vsub.s32 0, %v1065
        %v1067 = vrot.slane %v935, %v1066
        %v1068 = vlaneseq
        %v1069 = vshrl.u32 %v1068, 7
        %v1070 = vsub.s32 0, %v1069
        %v1071 = vrot.slane %v943, %v1070
        %v1072 = vlaneseq
        %v1073 = vshrl.u32 %v1072, 7
        %v1074 = vsub.s32 0, %v1073
        %v1075 = vrot.slane %v945, %v1074
        %v1076 = vlaneseq
        %v1077 = vshrl.u32 %v1076, 7
        %v1078 = vsub.s32 0, %v1077
        %v1079 = vrot.slane %v928, %v1078
        %v1080 = vlaneseq
        %v1081 = vshrl.u32 %v1080, 7
        %v1082 = vsub.s32 0, %v1081
        %v1083 = vrot.slane %v942, %v1082
        %v1084 = vlaneseq
        %v1085 = vshrl.u32 %v1084, 7
        %v1086 = vsub.s32 0, %v1085
        %v1087 = vrot.slane %v944, %v1086
        %v1088 = vlaneseq
        %v1089 = vshrl.u32 %v1088, 7
        %v1090 = vsub.s32 0, %v1089
        %v1091 = vrot.slane %v946, %v1090
        %v1092 = vlaneseq
        %v1093 = vshrl.u32 %v1092, 7
        %v1094 = vsub.s32 0, %v1093
        %v1095 = vrot.slane %v970, %v1094
        %v1096 = vlaneseq
        %v1097 = vshrl.u32 %v1096, 7
        %v1098 = vsub.s32 0, %v1097
        %v1099 = vrot.slane %v984, %v1098
        %v1100 = vlaneseq
        %v1101 = vshrl.u32 %v1100, 7
        %v1102 = vsub.s32 0, %v1101
        %v1103 = vrot.slane %v992, %v1102
        %v1104 = vlaneseq
        %v1105 = vshrl.u32 %v1104, 7
        %v1106 = vsub.s32 0, %v1105
        %v1107 = vrot.slane %v994, %v1106
        %v1108 = vlaneseq
        %v1109 = vshrl.u32 %v1108, 7
        %v1110 = vsub.s32 0, %v1109
        %v1111 = vrot.slane %v977, %v1110
        %v1112 = vlaneseq
        %v1113 = vshrl.u32 %v1112, 7
        %v1114 = vsub.s32 0, %v1113
        %v1115 = vrot.slane %v991, %v1114
        %v1116 = vlaneseq
        %v1117 = vshrl.u32 %v1116, 7
        %v1118 = vsub.s32 0, %v1117
        %v1119 = vrot.slane %v993, %v1118
        %v1120 = vlaneseq
        %v1121 = vshrl.u32 %v1120, 7
        %v1122 = vsub.s32 0, %v1121
        %v1123 = vrot.slane %v995, %v1122
        %v1156 = vadd.f32 %v638, %v999
        %v1157 = vadd.f32 %v643, %v1003
        %v1158 = vadd.f32 %v648, %v1007
        %v1159 = vadd.f32 %v653, %v1011
        %v1160 = vadd.f32 %v658, %v1015
        %v1161 = vadd.f32 %v663, %v1019
        %v1162 = vadd.f32 %v668, %v1023
        %v1163 = vadd.f32 %v673, %v1027
        %v1164 = vadd.f32 %v678, %v1031
        %v1165 = vadd.f32 %v683, %v1035
        %v1166 = vadd.f32 %v688, %v1039
        %v1167 = vadd.f32 %v693, %v1043
        %v1168 = vadd.f32 %v698, %v1047
        %v1169 = vadd.f32 %v703, %v1051
        %v1170 = vadd.f32 %v708, %v1055
        %v1171 = vadd.f32 %v713, %v1059
        %v1172 = vadd.f32 %v718, %v1063
        %v1173 = vadd.f32 %v723, %v1067
        %v1174 = vadd.f32 %v728, %v1071
        %v1175 = vadd.f32 %v733, %v1075
        %v1176 = vadd.f32 %v738, %v1079
        %v1177 = vadd.f32 %v743, %v1083
        %v1178 = vadd.f32 %v748, %v1087
        %v1179 = vadd.f32 %v753, %v1091
        %v1180 = vadd.f32 %v758, %v1095
        %v1181 = vadd.f32 %v763, %v1099
        %v1182 = vadd.f32 %v768, %v1103
        %v1183 = vadd.f32 %v773, %v1107
        %v1184 = vadd.f32 %v778, %v1111
        %v1185 = vadd.f32 %v783, %v1115
        %v1186 = vadd.f32 %v788, %v1119
        %v1187 = vadd.f32 %v793, %v1123
        %v1188 = vtanh.pop %v1156
        %v1189 = vtanh.pop %v1157
        %v1190 = vtanh.pop %v1158
        %v1191 = vtanh.pop %v1159
        %v1192 = vtanh.pop %v1160
        %v1193 = vtanh.pop %v1161
        %v1194 = vtanh.pop %v1162
        %v1195 = vtanh.pop %v1163
        %v1196 = vtanh.pop %v1164
        %v1197 = vtanh.pop %v1165
        %v1198 = vtanh.pop %v1166
        %v1199 = vtanh.pop %v1167
        %v1200 = vtanh.pop %v1168
        %v1201 = vtanh.pop %v1169
        %v1202 = vtanh.pop %v1170
        %v1203 = vtanh.pop %v1171
        %v1204 = vtanh.pop %v1172
        %v1205 = vtanh.pop %v1173
        %v1206 = vtanh.pop %v1174
        %v1207 = vtanh.pop %v1175
        %v1208 = vtanh.pop %v1176
        %v1209 = vtanh.pop %v1177
        %v1210 = vtanh.pop %v1178
        %v1211 = vtanh.pop %v1179
        %v1212 = vtanh.pop %v1180
        %v1213 = vtanh.pop %v1181
        %v1214 = vtanh.pop %v1182
        %v1215 = vtanh.pop %v1183
        %v1216 = vtanh.pop %v1184
        %v1217 = vtanh.pop %v1185
        %v1218 = vtanh.pop %v1186
        %v1219 = vtanh.pop %v1187
        %v1220 = vld [vmem:[%s5] sm:$0x1]
        %v1222 = vlaneseq
        %v1223 = vshrl.u32 %v1222, 7
        %v1224 = vsub.s32 0, %v1223
        %v1225 = vrot.slane %v1220, %v1224
        %v1227 = vmul.f32 %v1188, %v1225
        %v1228 = vmul.f32 %v1189, %v1225
        %v1229 = vmul.f32 %v1190, %v1225
        %v1230 = vmul.f32 %v1191, %v1225
        %v1231 = vmul.f32 %v1192, %v1225
        %v1232 = vmul.f32 %v1193, %v1225
        %v1233 = vmul.f32 %v1194, %v1225
        %v1234 = vmul.f32 %v1195, %v1225
        %v1235 = vmul.f32 %v1196, %v1225
        %v1236 = vmul.f32 %v1197, %v1225
        %v1237 = vmul.f32 %v1198, %v1225
        %v1238 = vmul.f32 %v1199, %v1225
        %v1239 = vmul.f32 %v1200, %v1225
        %v1240 = vmul.f32 %v1201, %v1225
        %v1241 = vmul.f32 %v1202, %v1225
        %v1242 = vmul.f32 %v1203, %v1225
        %v1243 = vmul.f32 %v1204, %v1225
        %v1244 = vmul.f32 %v1205, %v1225
        %v1245 = vmul.f32 %v1206, %v1225
        %v1246 = vmul.f32 %v1207, %v1225
        %v1247 = vmul.f32 %v1208, %v1225
        %v1248 = vmul.f32 %v1209, %v1225
        %v1249 = vmul.f32 %v1210, %v1225
        %v1250 = vmul.f32 %v1211, %v1225
        %v1251 = vmul.f32 %v1212, %v1225
        %v1252 = vmul.f32 %v1213, %v1225
        %v1253 = vmul.f32 %v1214, %v1225
        %v1254 = vmul.f32 %v1215, %v1225
        %v1255 = vmul.f32 %v1216, %v1225
        %v1256 = vmul.f32 %v1217, %v1225
        %v1257 = vmul.f32 %v1218, %v1225
        %v1258 = vmul.f32 %v1219, %v1225
        %1259 = vadd.xlane.f32.xlu0 %v1227
        %v1260 = vpop.xlane.xlu0 %1259
        %1261 = vadd.xlane.f32.xlu0 %v1228
        %v1262 = vpop.xlane.xlu0 %1261
        %1263 = vadd.xlane.f32.xlu0 %v1229
        %v1264 = vpop.xlane.xlu0 %1263
        %1265 = vadd.xlane.f32.xlu0 %v1230
        %v1266 = vpop.xlane.xlu0 %1265
        %1267 = vadd.xlane.f32.xlu0 %v1231
        %v1268 = vpop.xlane.xlu0 %1267
        %1269 = vadd.xlane.f32.xlu0 %v1232
        %v1270 = vpop.xlane.xlu0 %1269
        %1271 = vadd.xlane.f32.xlu0 %v1233
        %v1272 = vpop.xlane.xlu0 %1271
        %1273 = vadd.xlane.f32.xlu0 %v1234
        %v1274 = vpop.xlane.xlu0 %1273
        %1275 = vadd.xlane.f32.xlu0 %v1235
        %v1276 = vpop.xlane.xlu0 %1275
        %1277 = vadd.xlane.f32.xlu0 %v1236
        %v1278 = vpop.xlane.xlu0 %1277
        %1279 = vadd.xlane.f32.xlu0 %v1237
        %v1280 = vpop.xlane.xlu0 %1279
        %1281 = vadd.xlane.f32.xlu0 %v1238
        %v1282 = vpop.xlane.xlu0 %1281
        %1283 = vadd.xlane.f32.xlu0 %v1239
        %v1284 = vpop.xlane.xlu0 %1283
        %1285 = vadd.xlane.f32.xlu0 %v1240
        %v1286 = vpop.xlane.xlu0 %1285
        %1287 = vadd.xlane.f32.xlu0 %v1241
        %v1288 = vpop.xlane.xlu0 %1287
        %1289 = vadd.xlane.f32.xlu0 %v1242
        %v1290 = vpop.xlane.xlu0 %1289
        %1291 = vadd.xlane.f32.xlu0 %v1243
        %v1292 = vpop.xlane.xlu0 %1291
        %1293 = vadd.xlane.f32.xlu0 %v1244
        %v1294 = vpop.xlane.xlu0 %1293
        %1295 = vadd.xlane.f32.xlu0 %v1245
        %v1296 = vpop.xlane.xlu0 %1295
        %1297 = vadd.xlane.f32.xlu0 %v1246
        %v1298 = vpop.xlane.xlu0 %1297
        %1299 = vadd.xlane.f32.xlu0 %v1247
        %v1300 = vpop.xlane.xlu0 %1299
        %1301 = vadd.xlane.f32.xlu0 %v1248
        %v1302 = vpop.xlane.xlu0 %1301
        %1303 = vadd.xlane.f32.xlu0 %v1249
        %v1304 = vpop.xlane.xlu0 %1303
        %1305 = vadd.xlane.f32.xlu0 %v1250
        %v1306 = vpop.xlane.xlu0 %1305
        %1307 = vadd.xlane.f32.xlu0 %v1251
        %v1308 = vpop.xlane.xlu0 %1307
        %1309 = vadd.xlane.f32.xlu0 %v1252
        %v1310 = vpop.xlane.xlu0 %1309
        %1311 = vadd.xlane.f32.xlu0 %v1253
        %v1312 = vpop.xlane.xlu0 %1311
        %1313 = vadd.xlane.f32.xlu0 %v1254
        %v1314 = vpop.xlane.xlu0 %1313
        %1315 = vadd.xlane.f32.xlu0 %v1255
        %v1316 = vpop.xlane.xlu0 %1315
        %1317 = vadd.xlane.f32.xlu0 %v1256
        %v1318 = vpop.xlane.xlu0 %1317
        %1319 = vadd.xlane.f32.xlu0 %v1257
        %v1320 = vpop.xlane.xlu0 %1319
        %1321 = vadd.xlane.f32.xlu0 %v1258
        %v1322 = vpop.xlane.xlu0 %1321
        %s1323 = sld [smem:[#allocation2]]
        %v1324 = vstv %s1323
        %v1325 = vadd.f32 %v1260, %v1324
        %v1326 = vadd.f32 %v1262, %v1324
        %v1327 = vadd.f32 %v1264, %v1324
        %v1328 = vadd.f32 %v1266, %v1324
        %v1329 = vadd.f32 %v1268, %v1324
        %v1330 = vadd.f32 %v1270, %v1324
        %v1331 = vadd.f32 %v1272, %v1324
        %v1332 = vadd.f32 %v1274, %v1324
        %v1333 = vadd.f32 %v1276, %v1324
        %v1334 = vadd.f32 %v1278, %v1324
        %v1335 = vadd.f32 %v1280, %v1324
        %v1336 = vadd.f32 %v1282, %v1324
        %v1337 = vadd.f32 %v1284, %v1324
        %v1338 = vadd.f32 %v1286, %v1324
        %v1339 = vadd.f32 %v1288, %v1324
        %v1340 = vadd.f32 %v1290, %v1324
        %v1341 = vadd.f32 %v1292, %v1324
        %v1342 = vadd.f32 %v1294, %v1324
        %v1343 = vadd.f32 %v1296, %v1324
        %v1344 = vadd.f32 %v1298, %v1324
        %v1345 = vadd.f32 %v1300, %v1324
        %v1346 = vadd.f32 %v1302, %v1324
        %v1347 = vadd.f32 %v1304, %v1324
        %v1348 = vadd.f32 %v1306, %v1324
        %v1349 = vadd.f32 %v1308, %v1324
        %v1350 = vadd.f32 %v1310, %v1324
        %v1351 = vadd.f32 %v1312, %v1324
        %v1352 = vadd.f32 %v1314, %v1324
        %v1353 = vadd.f32 %v1316, %v1324
        %v1354 = vadd.f32 %v1318, %v1324
        %v1355 = vadd.f32 %v1320, %v1324
        %v1356 = vadd.f32 %v1322, %v1324
        %v1389 = vlaneseq
        %v1390 = vand.u32 %v1389, 127
        %v1391 = vlaneseq
        %v1392 = vshrl.u32 %v1391, 7
        %v1393 = vsub.s32 %v1390, %v1392
        %v1394 = vrot.slane %v1325, %v1393
        %v1395 = vlaneseq
        %v1396 = vshrl.u32 %v1395, 7
        %v1397 = vsub.s32 %v1390, %v1396
        %v1398 = vrot.slane %v1326, %v1397
        %v1399 = vlaneseq
        %v1400 = vshrl.u32 %v1399, 7
        %v1401 = vsub.s32 %v1390, %v1400
        %v1402 = vrot.slane %v1327, %v1401
        %v1403 = vlaneseq
        %v1404 = vshrl.u32 %v1403, 7
        %v1405 = vsub.s32 %v1390, %v1404
        %v1406 = vrot.slane %v1328, %v1405
        %v1407 = vlaneseq
        %v1408 = vshrl.u32 %v1407, 7
        %v1409 = vsub.s32 %v1390, %v1408
        %v1410 = vrot.slane %v1329, %v1409
        %v1411 = vlaneseq
        %v1412 = vshrl.u32 %v1411, 7
        %v1413 = vsub.s32 %v1390, %v1412
        %v1414 = vrot.slane %v1330, %v1413
        %v1415 = vlaneseq
        %v1416 = vshrl.u32 %v1415, 7
        %v1417 = vsub.s32 %v1390, %v1416
        %v1418 = vrot.slane %v1331, %v1417
        %v1419 = vlaneseq
        %v1420 = vshrl.u32 %v1419, 7
        %v1421 = vsub.s32 %v1390, %v1420
        %v1422 = vrot.slane %v1332, %v1421
        %v1423 = vlaneseq
        %v1424 = vshrl.u32 %v1423, 7
        %v1425 = vsub.s32 %v1390, %v1424
        %v1426 = vrot.slane %v1333, %v1425
        %v1427 = vlaneseq
        %v1428 = vshrl.u32 %v1427, 7
        %v1429 = vsub.s32 %v1390, %v1428
        %v1430 = vrot.slane %v1334, %v1429
        %v1431 = vlaneseq
        %v1432 = vshrl.u32 %v1431, 7
        %v1433 = vsub.s32 %v1390, %v1432
        %v1434 = vrot.slane %v1335, %v1433
        %v1435 = vlaneseq
        %v1436 = vshrl.u32 %v1435, 7
        %v1437 = vsub.s32 %v1390, %v1436
        %v1438 = vrot.slane %v1336, %v1437
        %v1439 = vlaneseq
        %v1440 = vshrl.u32 %v1439, 7
        %v1441 = vsub.s32 %v1390, %v1440
        %v1442 = vrot.slane %v1337, %v1441
        %v1443 = vlaneseq
        %v1444 = vshrl.u32 %v1443, 7
        %v1445 = vsub.s32 %v1390, %v1444
        %v1446 = vrot.slane %v1338, %v1445
        %v1447 = vlaneseq
        %v1448 = vshrl.u32 %v1447, 7
        %v1449 = vsub.s32 %v1390, %v1448
        %v1450 = vrot.slane %v1339, %v1449
        %v1451 = vlaneseq
        %v1452 = vshrl.u32 %v1451, 7
        %v1453 = vsub.s32 %v1390, %v1452
        %v1454 = vrot.slane %v1340, %v1453
        %v1455 = vlaneseq
        %v1456 = vshrl.u32 %v1455, 7
        %v1457 = vsub.s32 %v1390, %v1456
        %v1458 = vrot.slane %v1341, %v1457
        %v1459 = vlaneseq
        %v1460 = vshrl.u32 %v1459, 7
        %v1461 = vsub.s32 %v1390, %v1460
        %v1462 = vrot.slane %v1342, %v1461
        %v1463 = vlaneseq
        %v1464 = vshrl.u32 %v1463, 7
        %v1465 = vsub.s32 %v1390, %v1464
        %v1466 = vrot.slane %v1343, %v1465
        %v1467 = vlaneseq
        %v1468 = vshrl.u32 %v1467, 7
        %v1469 = vsub.s32 %v1390, %v1468
        %v1470 = vrot.slane %v1344, %v1469
        %v1471 = vlaneseq
        %v1472 = vshrl.u32 %v1471, 7
        %v1473 = vsub.s32 %v1390, %v1472
        %v1474 = vrot.slane %v1345, %v1473
        %v1475 = vlaneseq
        %v1476 = vshrl.u32 %v1475, 7
        %v1477 = vsub.s32 %v1390, %v1476
        %v1478 = vrot.slane %v1346, %v1477
        %v1479 = vlaneseq
        %v1480 = vshrl.u32 %v1479, 7
        %v1481 = vsub.s32 %v1390, %v1480
        %v1482 = vrot.slane %v1347, %v1481
        %v1483 = vlaneseq
        %v1484 = vshrl.u32 %v1483, 7
        %v1485 = vsub.s32 %v1390, %v1484
        %v1486 = vrot.slane %v1348, %v1485
        %v1487 = vlaneseq
        %v1488 = vshrl.u32 %v1487, 7
        %v1489 = vsub.s32 %v1390, %v1488
        %v1490 = vrot.slane %v1349, %v1489
        %v1491 = vlaneseq
        %v1492 = vshrl.u32 %v1491, 7
        %v1493 = vsub.s32 %v1390, %v1492
        %v1494 = vrot.slane %v1350, %v1493
        %v1495 = vlaneseq
        %v1496 = vshrl.u32 %v1495, 7
        %v1497 = vsub.s32 %v1390, %v1496
        %v1498 = vrot.slane %v1351, %v1497
        %v1499 = vlaneseq
        %v1500 = vshrl.u32 %v1499, 7
        %v1501 = vsub.s32 %v1390, %v1500
        %v1502 = vrot.slane %v1352, %v1501
        %v1503 = vlaneseq
        %v1504 = vshrl.u32 %v1503, 7
        %v1505 = vsub.s32 %v1390, %v1504
        %v1506 = vrot.slane %v1353, %v1505
        %v1507 = vlaneseq
        %v1508 = vshrl.u32 %v1507, 7
        %v1509 = vsub.s32 %v1390, %v1508
        %v1510 = vrot.slane %v1354, %v1509
        %v1511 = vlaneseq
        %v1512 = vshrl.u32 %v1511, 7
        %v1513 = vsub.s32 %v1390, %v1512
        %v1514 = vrot.slane %v1355, %v1513
        %v1515 = vlaneseq
        %v1516 = vshrl.u32 %v1515, 7
        %v1517 = vsub.s32 %v1390, %v1516
        %v1518 = vrot.slane %v1356, %v1517
        %vm1519 = vcmask 1041409
        %v1520 = vsel %vm1519, %v1398, %v1394
        %vm1521 = vcmask 1042434
        %v1522 = vsel %vm1521, %v1402, %v1520
        %vm1523 = vcmask 1043459
        %v1524 = vsel %vm1523, %v1406, %v1522
        %vm1525 = vcmask 1044484
        %v1526 = vsel %vm1525, %v1410, %v1524
        %vm1527 = vcmask 1045509
        %v1528 = vsel %vm1527, %v1414, %v1526
        %vm1529 = vcmask 1046534
        %v1530 = vsel %vm1529, %v1418, %v1528
        %vm1531 = vcmask 1047559
        %v1532 = vsel %vm1531, %v1422, %v1530
        %v1533 = vsel %vm1519, %v1430, %v1426
        %v1534 = vsel %vm1521, %v1434, %v1533
        %v1535 = vsel %vm1523, %v1438, %v1534
        %v1536 = vsel %vm1525, %v1442, %v1535
        %v1537 = vsel %vm1527, %v1446, %v1536
        %v1538 = vsel %vm1529, %v1450, %v1537
        %v1539 = vsel %vm1531, %v1454, %v1538
        %v1540 = vsel %vm1519, %v1462, %v1458
        %v1541 = vsel %vm1521, %v1466, %v1540
        %v1542 = vsel %vm1523, %v1470, %v1541
        %v1543 = vsel %vm1525, %v1474, %v1542
        %v1544 = vsel %vm1527, %v1478, %v1543
        %v1545 = vsel %vm1529, %v1482, %v1544
        %v1546 = vsel %vm1531, %v1486, %v1545
        %v1547 = vsel %vm1519, %v1494, %v1490
        %v1548 = vsel %vm1521, %v1498, %v1547
        %v1549 = vsel %vm1523, %v1502, %v1548
        %v1550 = vsel %vm1525, %v1506, %v1549
        %v1551 = vsel %vm1527, %v1510, %v1550
        %v1552 = vsel %vm1529, %v1514, %v1551
        %v1553 = vsel %vm1531, %v1518, %v1552
        %vm1558 = vcmask 64512
        %v1559 = vsel %vm1558, %v1532, -inf
        %1560 = vmax.xlane.f32.xlu0 %v1559
        %v1561 = vpop.xlane.xlu0 %1560
        %v1562 = vsel %vm1558, %v1539, -inf
        %1563 = vmax.xlane.f32.xlu0 %v1562
        %v1564 = vpop.xlane.xlu0 %1563
        %v1565 = vsel %vm1558, %v1546, -inf
        %1566 = vmax.xlane.f32.xlu0 %v1565
        %v1567 = vpop.xlane.xlu0 %1566
        %v1568 = vsel %vm1558, %v1553, -inf
        %1569 = vmax.xlane.f32.xlu0 %v1568
        %v1570 = vpop.xlane.xlu0 %1569
        %v1575 = vlaneseq
        %v1576 = vshrl.u32 %v1575, 7
        %v1577 = vsub.s32 0, %v1576
        %v1578 = vrot.slane %v1561, %v1577
        %v1579 = vlaneseq
        %v1580 = vshrl.u32 %v1579, 7
        %v1581 = vsub.s32 1, %v1580
        %v1582 = vrot.slane %v1561, %v1581
        %v1583 = vlaneseq
        %v1584 = vshrl.u32 %v1583, 7
        %v1585 = vsub.s32 2, %v1584
        %v1586 = vrot.slane %v1561, %v1585
        %v1587 = vlaneseq
        %v1588 = vshrl.u32 %v1587, 7
        %v1589 = vsub.s32 3, %v1588
        %v1590 = vrot.slane %v1561, %v1589
        %v1591 = vlaneseq
        %v1592 = vshrl.u32 %v1591, 7
        %v1593 = vsub.s32 4, %v1592
        %v1594 = vrot.slane %v1561, %v1593
        %v1595 = vlaneseq
        %v1596 = vshrl.u32 %v1595, 7
        %v1597 = vsub.s32 5, %v1596
        %v1598 = vrot.slane %v1561, %v1597
        %v1599 = vlaneseq
        %v1600 = vshrl.u32 %v1599, 7
        %v1601 = vsub.s32 6, %v1600
        %v1602 = vrot.slane %v1561, %v1601
        %v1603 = vlaneseq
        %v1604 = vshrl.u32 %v1603, 7
        %v1605 = vsub.s32 7, %v1604
        %v1606 = vrot.slane %v1561, %v1605
        %v1607 = vlaneseq
        %v1608 = vshrl.u32 %v1607, 7
        %v1609 = vsub.s32 0, %v1608
        %v1610 = vrot.slane %v1564, %v1609
        %v1611 = vlaneseq
        %v1612 = vshrl.u32 %v1611, 7
        %v1613 = vsub.s32 1, %v1612
        %v1614 = vrot.slane %v1564, %v1613
        %v1615 = vlaneseq
        %v1616 = vshrl.u32 %v1615, 7
        %v1617 = vsub.s32 2, %v1616
        %v1618 = vrot.slane %v1564, %v1617
        %v1619 = vlaneseq
        %v1620 = vshrl.u32 %v1619, 7
        %v1621 = vsub.s32 3, %v1620
        %v1622 = vrot.slane %v1564, %v1621
        %v1623 = vlaneseq
        %v1624 = vshrl.u32 %v1623, 7
        %v1625 = vsub.s32 4, %v1624
        %v1626 = vrot.slane %v1564, %v1625
        %v1627 = vlaneseq
        %v1628 = vshrl.u32 %v1627, 7
        %v1629 = vsub.s32 5, %v1628
        %v1630 = vrot.slane %v1564, %v1629
        %v1631 = vlaneseq
        %v1632 = vshrl.u32 %v1631, 7
        %v1633 = vsub.s32 6, %v1632
        %v1634 = vrot.slane %v1564, %v1633
        %v1635 = vlaneseq
        %v1636 = vshrl.u32 %v1635, 7
        %v1637 = vsub.s32 7, %v1636
        %v1638 = vrot.slane %v1564, %v1637
        %v1639 = vlaneseq
        %v1640 = vshrl.u32 %v1639, 7
        %v1641 = vsub.s32 0, %v1640
        %v1642 = vrot.slane %v1567, %v1641
        %v1643 = vlaneseq
        %v1644 = vshrl.u32 %v1643, 7
        %v1645 = vsub.s32 1, %v1644
        %v1646 = vrot.slane %v1567, %v1645
        %v1647 = vlaneseq
        %v1648 = vshrl.u32 %v1647, 7
        %v1649 = vsub.s32 2, %v1648
        %v1650 = vrot.slane %v1567, %v1649
        %v1651 = vlaneseq
        %v1652 = vshrl.u32 %v1651, 7
        %v1653 = vsub.s32 3, %v1652
        %v1654 = vrot.slane %v1567, %v1653
        %v1655 = vlaneseq
        %v1656 = vshrl.u32 %v1655, 7
        %v1657 = vsub.s32 4, %v1656
        %v1658 = vrot.slane %v1567, %v1657
        %v1659 = vlaneseq
        %v1660 = vshrl.u32 %v1659, 7
        %v1661 = vsub.s32 5, %v1660
        %v1662 = vrot.slane %v1567, %v1661
        %v1663 = vlaneseq
        %v1664 = vshrl.u32 %v1663, 7
        %v1665 = vsub.s32 6, %v1664
        %v1666 = vrot.slane %v1567, %v1665
        %v1667 = vlaneseq
        %v1668 = vshrl.u32 %v1667, 7
        %v1669 = vsub.s32 7, %v1668
        %v1670 = vrot.slane %v1567, %v1669
        %v1671 = vlaneseq
        %v1672 = vshrl.u32 %v1671, 7
        %v1673 = vsub.s32 0, %v1672
        %v1674 = vrot.slane %v1570, %v1673
        %v1675 = vlaneseq
        %v1676 = vshrl.u32 %v1675, 7
        %v1677 = vsub.s32 1, %v1676
        %v1678 = vrot.slane %v1570, %v1677
        %v1679 = vlaneseq
        %v1680 = vshrl.u32 %v1679, 7
        %v1681 = vsub.s32 2, %v1680
        %v1682 = vrot.slane %v1570, %v1681
        %v1683 = vlaneseq
        %v1684 = vshrl.u32 %v1683, 7
        %v1685 = vsub.s32 3, %v1684
        %v1686 = vrot.slane %v1570, %v1685
        %v1687 = vlaneseq
        %v1688 = vshrl.u32 %v1687, 7
        %v1689 = vsub.s32 4, %v1688
        %v1690 = vrot.slane %v1570, %v1689
        %v1691 = vlaneseq
        %v1692 = vshrl.u32 %v1691, 7
        %v1693 = vsub.s32 5, %v1692
        %v1694 = vrot.slane %v1570, %v1693
        %v1695 = vlaneseq
        %v1696 = vshrl.u32 %v1695, 7
        %v1697 = vsub.s32 6, %v1696
        %v1698 = vrot.slane %v1570, %v1697
        %v1699 = vlaneseq
        %v1700 = vshrl.u32 %v1699, 7
        %v1701 = vsub.s32 7, %v1700
        %v1702 = vrot.slane %v1570, %v1701
        %v1735 = vsub.f32 %v1325, %v1578
        %v1736 = vsub.f32 %v1326, %v1582
        %v1737 = vsub.f32 %v1327, %v1586
        %v1738 = vsub.f32 %v1328, %v1590
        %v1739 = vsub.f32 %v1329, %v1594
        %v1740 = vsub.f32 %v1330, %v1598
        %v1741 = vsub.f32 %v1331, %v1602
        %v1742 = vsub.f32 %v1332, %v1606
        %v1743 = vsub.f32 %v1333, %v1610
        %v1744 = vsub.f32 %v1334, %v1614
        %v1745 = vsub.f32 %v1335, %v1618
        %v1746 = vsub.f32 %v1336, %v1622
        %v1747 = vsub.f32 %v1337, %v1626
        %v1748 = vsub.f32 %v1338, %v1630
        %v1749 = vsub.f32 %v1339, %v1634
        %v1750 = vsub.f32 %v1340, %v1638
        %v1751 = vsub.f32 %v1341, %v1642
        %v1752 = vsub.f32 %v1342, %v1646
        %v1753 = vsub.f32 %v1343, %v1650
        %v1754 = vsub.f32 %v1344, %v1654
        %v1755 = vsub.f32 %v1345, %v1658
        %v1756 = vsub.f32 %v1346, %v1662
        %v1757 = vsub.f32 %v1347, %v1666
        %v1758 = vsub.f32 %v1348, %v1670
        %v1759 = vsub.f32 %v1349, %v1674
        %v1760 = vsub.f32 %v1350, %v1678
        %v1761 = vsub.f32 %v1351, %v1682
        %v1762 = vsub.f32 %v1352, %v1686
        %v1763 = vsub.f32 %v1353, %v1690
        %v1764 = vsub.f32 %v1354, %v1694
        %v1765 = vsub.f32 %v1355, %v1698
        %v1766 = vsub.f32 %v1356, %v1702
        %v1767 = vmul.f32 %v1735, 1.442695
        %v1768 = vpow.pop %v1767
        %v1769 = vmul.f32 %v1736, 1.442695
        %v1770 = vpow.pop %v1769
        %v1771 = vmul.f32 %v1737, 1.442695
        %v1772 = vpow.pop %v1771
        %v1773 = vmul.f32 %v1738, 1.442695
        %v1774 = vpow.pop %v1773
        %v1775 = vmul.f32 %v1739, 1.442695
        %v1776 = vpow.pop %v1775
        %v1777 = vmul.f32 %v1740, 1.442695
        %v1778 = vpow.pop %v1777
        %v1779 = vmul.f32 %v1741, 1.442695
        %v1780 = vpow.pop %v1779
        %v1781 = vmul.f32 %v1742, 1.442695
        %v1782 = vpow.pop %v1781
        %v1783 = vmul.f32 %v1743, 1.442695
        %v1784 = vpow.pop %v1783
        %v1785 = vmul.f32 %v1744, 1.442695
        %v1786 = vpow.pop %v1785
        %v1787 = vmul.f32 %v1745, 1.442695
        %v1788 = vpow.pop %v1787
        %v1789 = vmul.f32 %v1746, 1.442695
        %v1790 = vpow.pop %v1789
        %v1791 = vmul.f32 %v1747, 1.442695
        %v1792 = vpow.pop %v1791
        %v1793 = vmul.f32 %v1748, 1.442695
        %v1794 = vpow.pop %v1793
        %v1795 = vmul.f32 %v1749, 1.442695
        %v1796 = vpow.pop %v1795
        %v1797 = vmul.f32 %v1750, 1.442695
        %v1798 = vpow.pop %v1797
        %v1799 = vmul.f32 %v1751, 1.442695
        %v1800 = vpow.pop %v1799
        %v1801 = vmul.f32 %v1752, 1.442695
        %v1802 = vpow.pop %v1801
        %v1803 = vmul.f32 %v1753, 1.442695
        %v1804 = vpow.pop %v1803
        %v1805 = vmul.f32 %v1754, 1.442695
        %v1806 = vpow.pop %v1805
        %v1807 = vmul.f32 %v1755, 1.442695
        %v1808 = vpow.pop %v1807
        %v1809 = vmul.f32 %v1756, 1.442695
        %v1810 = vpow.pop %v1809
        %v1811 = vmul.f32 %v1757, 1.442695
        %v1812 = vpow.pop %v1811
        %v1813 = vmul.f32 %v1758, 1.442695
        %v1814 = vpow.pop %v1813
        %v1815 = vmul.f32 %v1759, 1.442695
        %v1816 = vpow.pop %v1815
        %v1817 = vmul.f32 %v1760, 1.442695
        %v1818 = vpow.pop %v1817
        %v1819 = vmul.f32 %v1761, 1.442695
        %v1820 = vpow.pop %v1819
        %v1821 = vmul.f32 %v1762, 1.442695
        %v1822 = vpow.pop %v1821
        %v1823 = vmul.f32 %v1763, 1.442695
        %v1824 = vpow.pop %v1823
        %v1825 = vmul.f32 %v1764, 1.442695
        %v1826 = vpow.pop %v1825
        %v1827 = vmul.f32 %v1765, 1.442695
        %v1828 = vpow.pop %v1827
        %v1829 = vmul.f32 %v1766, 1.442695
        %v1830 = vpow.pop %v1829
        %1863 = vset.pattern.permute.xlu0 0
        %1864 = vperm.xlu0 %1863, %v1768
        %v1865 = vpop.permute.xlu0 %1864
        %1866 = vset.pattern.permute.xlu0 0
        %1867 = vperm.xlu0 %1866, %v1770
        %v1868 = vpop.permute.xlu0 %1867
        %1869 = vset.pattern.permute.xlu0 0
        %1870 = vperm.xlu0 %1869, %v1772
        %v1871 = vpop.permute.xlu0 %1870
        %1872 = vset.pattern.permute.xlu0 0
        %1873 = vperm.xlu0 %1872, %v1774
        %v1874 = vpop.permute.xlu0 %1873
        %1875 = vset.pattern.permute.xlu0 0
        %1876 = vperm.xlu0 %1875, %v1776
        %v1877 = vpop.permute.xlu0 %1876
        %1878 = vset.pattern.permute.xlu0 0
        %1879 = vperm.xlu0 %1878, %v1778
        %v1880 = vpop.permute.xlu0 %1879
        %1881 = vset.pattern.permute.xlu0 0
        %1882 = vperm.xlu0 %1881, %v1780
        %v1883 = vpop.permute.xlu0 %1882
        %1884 = vset.pattern.permute.xlu0 0
        %1885 = vperm.xlu0 %1884, %v1782
        %v1886 = vpop.permute.xlu0 %1885
        %1887 = vset.pattern.permute.xlu0 0
        %1888 = vperm.xlu0 %1887, %v1784
        %v1889 = vpop.permute.xlu0 %1888
        %1890 = vset.pattern.permute.xlu0 0
        %1891 = vperm.xlu0 %1890, %v1786
        %v1892 = vpop.permute.xlu0 %1891
        %1893 = vset.pattern.permute.xlu0 0
        %1894 = vperm.xlu0 %1893, %v1788
        %v1895 = vpop.permute.xlu0 %1894
        %1896 = vset.pattern.permute.xlu0 0
        %1897 = vperm.xlu0 %1896, %v1790
        %v1898 = vpop.permute.xlu0 %1897
        %1899 = vset.pattern.permute.xlu0 0
        %1900 = vperm.xlu0 %1899, %v1792
        %v1901 = vpop.permute.xlu0 %1900
        %1902 = vset.pattern.permute.xlu0 0
        %1903 = vperm.xlu0 %1902, %v1794
        %v1904 = vpop.permute.xlu0 %1903
        %1905 = vset.pattern.permute.xlu0 0
        %1906 = vperm.xlu0 %1905, %v1796
        %v1907 = vpop.permute.xlu0 %1906
        %1908 = vset.pattern.permute.xlu0 0
        %1909 = vperm.xlu0 %1908, %v1798
        %v1910 = vpop.permute.xlu0 %1909
        %1911 = vset.pattern.permute.xlu0 0
        %1912 = vperm.xlu0 %1911, %v1800
        %v1913 = vpop.permute.xlu0 %1912
        %1914 = vset.pattern.permute.xlu0 0
        %1915 = vperm.xlu0 %1914, %v1802
        %v1916 = vpop.permute.xlu0 %1915
        %1917 = vset.pattern.permute.xlu0 0
        %1918 = vperm.xlu0 %1917, %v1804
        %v1919 = vpop.permute.xlu0 %1918
        %1920 = vset.pattern.permute.xlu0 0
        %1921 = vperm.xlu0 %1920, %v1806
        %v1922 = vpop.permute.xlu0 %1921
        %1923 = vset.pattern.permute.xlu0 0
        %1924 = vperm.xlu0 %1923, %v1808
        %v1925 = vpop.permute.xlu0 %1924
        %1926 = vset.pattern.permute.xlu0 0
        %1927 = vperm.xlu0 %1926, %v1810
        %v1928 = vpop.permute.xlu0 %1927
        %1929 = vset.pattern.permute.xlu0 0
        %1930 = vperm.xlu0 %1929, %v1812
        %v1931 = vpop.permute.xlu0 %1930
        %1932 = vset.pattern.permute.xlu0 0
        %1933 = vperm.xlu0 %1932, %v1814
        %v1934 = vpop.permute.xlu0 %1933
        %1935 = vset.pattern.permute.xlu0 0
        %1936 = vperm.xlu0 %1935, %v1816
        %v1937 = vpop.permute.xlu0 %1936
        %1938 = vset.pattern.permute.xlu0 0
        %1939 = vperm.xlu0 %1938, %v1818
        %v1940 = vpop.permute.xlu0 %1939
        %1941 = vset.pattern.permute.xlu0 0
        %1942 = vperm.xlu0 %1941, %v1820
        %v1943 = vpop.permute.xlu0 %1942
        %1944 = vset.pattern.permute.xlu0 0
        %1945 = vperm.xlu0 %1944, %v1822
        %v1946 = vpop.permute.xlu0 %1945
        %1947 = vset.pattern.permute.xlu0 0
        %1948 = vperm.xlu0 %1947, %v1824
        %v1949 = vpop.permute.xlu0 %1948
        %1950 = vset.pattern.permute.xlu0 0
        %1951 = vperm.xlu0 %1950, %v1826
        %v1952 = vpop.permute.xlu0 %1951
        %1953 = vset.pattern.permute.xlu0 0
        %1954 = vperm.xlu0 %1953, %v1828
        %v1955 = vpop.permute.xlu0 %1954
        %1956 = vset.pattern.permute.xlu0 0
        %1957 = vperm.xlu0 %1956, %v1830
        %v1958 = vpop.permute.xlu0 %1957
        %v1959 = vlaneseq
        %v1960 = vshrl.u32 %v1959, 7
        %v1961 = vsub.s32 %v1390, %v1960
        %v1962 = vrot.slane %v1865, %v1961
        %v1963 = vlaneseq
        %v1964 = vshrl.u32 %v1963, 7
        %v1965 = vsub.s32 %v1390, %v1964
        %v1966 = vrot.slane %v1868, %v1965
        %v1967 = vlaneseq
        %v1968 = vshrl.u32 %v1967, 7
        %v1969 = vsub.s32 %v1390, %v1968
        %v1970 = vrot.slane %v1871, %v1969
        %v1971 = vlaneseq
        %v1972 = vshrl.u32 %v1971, 7
        %v1973 = vsub.s32 %v1390, %v1972
        %v1974 = vrot.slane %v1874, %v1973
        %v1975 = vlaneseq
        %v1976 = vshrl.u32 %v1975, 7
        %v1977 = vsub.s32 %v1390, %v1976
        %v1978 = vrot.slane %v1877, %v1977
        %v1979 = vlaneseq
        %v1980 = vshrl.u32 %v1979, 7
        %v1981 = vsub.s32 %v1390, %v1980
        %v1982 = vrot.slane %v1880, %v1981
        %v1983 = vlaneseq
        %v1984 = vshrl.u32 %v1983, 7
        %v1985 = vsub.s32 %v1390, %v1984
        %v1986 = vrot.slane %v1883, %v1985
        %v1987 = vlaneseq
        %v1988 = vshrl.u32 %v1987, 7
        %v1989 = vsub.s32 %v1390, %v1988
        %v1990 = vrot.slane %v1886, %v1989
        %v1991 = vlaneseq
        %v1992 = vshrl.u32 %v1991, 7
        %v1993 = vsub.s32 %v1390, %v1992
        %v1994 = vrot.slane %v1889, %v1993
        %v1995 = vlaneseq
        %v1996 = vshrl.u32 %v1995, 7
        %v1997 = vsub.s32 %v1390, %v1996
        %v1998 = vrot.slane %v1892, %v1997
        %v1999 = vlaneseq
        %v2000 = vshrl.u32 %v1999, 7
        %v2001 = vsub.s32 %v1390, %v2000
        %v2002 = vrot.slane %v1895, %v2001
        %v2003 = vlaneseq
        %v2004 = vshrl.u32 %v2003, 7
        %v2005 = vsub.s32 %v1390, %v2004
        %v2006 = vrot.slane %v1898, %v2005
        %v2007 = vlaneseq
        %v2008 = vshrl.u32 %v2007, 7
        %v2009 = vsub.s32 %v1390, %v2008
        %v2010 = vrot.slane %v1901, %v2009
        %v2011 = vlaneseq
        %v2012 = vshrl.u32 %v2011, 7
        %v2013 = vsub.s32 %v1390, %v2012
        %v2014 = vrot.slane %v1904, %v2013
        %v2015 = vlaneseq
        %v2016 = vshrl.u32 %v2015, 7
        %v2017 = vsub.s32 %v1390, %v2016
        %v2018 = vrot.slane %v1907, %v2017
        %v2019 = vlaneseq
        %v2020 = vshrl.u32 %v2019, 7
        %v2021 = vsub.s32 %v1390, %v2020
        %v2022 = vrot.slane %v1910, %v2021
        %v2023 = vlaneseq
        %v2024 = vshrl.u32 %v2023, 7
        %v2025 = vsub.s32 %v1390, %v2024
        %v2026 = vrot.slane %v1913, %v2025
        %v2027 = vlaneseq
        %v2028 = vshrl.u32 %v2027, 7
        %v2029 = vsub.s32 %v1390, %v2028
        %v2030 = vrot.slane %v1916, %v2029
        %v2031 = vlaneseq
        %v2032 = vshrl.u32 %v2031, 7
        %v2033 = vsub.s32 %v1390, %v2032
        %v2034 = vrot.slane %v1919, %v2033
        %v2035 = vlaneseq
        %v2036 = vshrl.u32 %v2035, 7
        %v2037 = vsub.s32 %v1390, %v2036
        %v2038 = vrot.slane %v1922, %v2037
        %v2039 = vlaneseq
        %v2040 = vshrl.u32 %v2039, 7
        %v2041 = vsub.s32 %v1390, %v2040
        %v2042 = vrot.slane %v1925, %v2041
        %v2043 = vlaneseq
        %v2044 = vshrl.u32 %v2043, 7
        %v2045 = vsub.s32 %v1390, %v2044
        %v2046 = vrot.slane %v1928, %v2045
        %v2047 = vlaneseq
        %v2048 = vshrl.u32 %v2047, 7
        %v2049 = vsub.s32 %v1390, %v2048
        %v2050 = vrot.slane %v1931, %v2049
        %v2051 = vlaneseq
        %v2052 = vshrl.u32 %v2051, 7
        %v2053 = vsub.s32 %v1390, %v2052
        %v2054 = vrot.slane %v1934, %v2053
        %v2055 = vlaneseq
        %v2056 = vshrl.u32 %v2055, 7
        %v2057 = vsub.s32 %v1390, %v2056
        %v2058 = vrot.slane %v1937, %v2057
        %v2059 = vlaneseq
        %v2060 = vshrl.u32 %v2059, 7
        %v2061 = vsub.s32 %v1390, %v2060
        %v2062 = vrot.slane %v1940, %v2061
        %v2063 = vlaneseq
        %v2064 = vshrl.u32 %v2063, 7
        %v2065 = vsub.s32 %v1390, %v2064
        %v2066 = vrot.slane %v1943, %v2065
        %v2067 = vlaneseq
        %v2068 = vshrl.u32 %v2067, 7
        %v2069 = vsub.s32 %v1390, %v2068
        %v2070 = vrot.slane %v1946, %v2069
        %v2071 = vlaneseq
        %v2072 = vshrl.u32 %v2071, 7
        %v2073 = vsub.s32 %v1390, %v2072
        %v2074 = vrot.slane %v1949, %v2073
        %v2075 = vlaneseq
        %v2076 = vshrl.u32 %v2075, 7
        %v2077 = vsub.s32 %v1390, %v2076
        %v2078 = vrot.slane %v1952, %v2077
        %v2079 = vlaneseq
        %v2080 = vshrl.u32 %v2079, 7
        %v2081 = vsub.s32 %v1390, %v2080
        %v2082 = vrot.slane %v1955, %v2081
        %v2083 = vlaneseq
        %v2084 = vshrl.u32 %v2083, 7
        %v2085 = vsub.s32 %v1390, %v2084
        %v2086 = vrot.slane %v1958, %v2085
        %v2087 = vsel %vm1519, %v1966, %v1962
        %v2088 = vsel %vm1521, %v1970, %v2087
        %v2089 = vsel %vm1523, %v1974, %v2088
        %v2090 = vsel %vm1525, %v1978, %v2089
        %v2091 = vsel %vm1527, %v1982, %v2090
        %v2092 = vsel %vm1529, %v1986, %v2091
        %v2093 = vsel %vm1531, %v1990, %v2092
        %v2094 = vsel %vm1519, %v1998, %v1994
        %v2095 = vsel %vm1521, %v2002, %v2094
        %v2096 = vsel %vm1523, %v2006, %v2095
        %v2097 = vsel %vm1525, %v2010, %v2096
        %v2098 = vsel %vm1527, %v2014, %v2097
        %v2099 = vsel %vm1529, %v2018, %v2098
        %v2100 = vsel %vm1531, %v2022, %v2099
        %v2101 = vsel %vm1519, %v2030, %v2026
        %v2102 = vsel %vm1521, %v2034, %v2101
        %v2103 = vsel %vm1523, %v2038, %v2102
        %v2104 = vsel %vm1525, %v2042, %v2103
        %v2105 = vsel %vm1527, %v2046, %v2104
        %v2106 = vsel %vm1529, %v2050, %v2105
        %v2107 = vsel %vm1531, %v2054, %v2106
        %v2108 = vsel %vm1519, %v2062, %v2058
        %v2109 = vsel %vm1521, %v2066, %v2108
        %v2110 = vsel %vm1523, %v2070, %v2109
        %v2111 = vsel %vm1525, %v2074, %v2110
        %v2112 = vsel %vm1527, %v2078, %v2111
        %v2113 = vsel %vm1529, %v2082, %v2112
        %v2114 = vsel %vm1531, %v2086, %v2113
        %v2119 = vsel %vm1558, %v2093, 0.0
        %2120 = vadd.xlane.f32.xlu0 %v2119
        %v2121 = vpop.xlane.xlu0 %2120
        %v2122 = vsel %vm1558, %v2100, 0.0
        %2123 = vadd.xlane.f32.xlu0 %v2122
        %v2124 = vpop.xlane.xlu0 %2123
        %v2125 = vsel %vm1558, %v2107, 0.0
        %2126 = vadd.xlane.f32.xlu0 %v2125
        %v2127 = vpop.xlane.xlu0 %2126
        %v2128 = vsel %vm1558, %v2114, 0.0
        %2129 = vadd.xlane.f32.xlu0 %v2128
        %v2130 = vpop.xlane.xlu0 %2129
        %v2135 = vlaneseq
        %v2136 = vshrl.u32 %v2135, 7
        %v2137 = vsub.s32 0, %v2136
        %v2138 = vrot.slane %v2121, %v2137
        %v2139 = vlaneseq
        %v2140 = vshrl.u32 %v2139, 7
        %v2141 = vsub.s32 1, %v2140
        %v2142 = vrot.slane %v2121, %v2141
        %v2143 = vlaneseq
        %v2144 = vshrl.u32 %v2143, 7
        %v2145 = vsub.s32 2, %v2144
        %v2146 = vrot.slane %v2121, %v2145
        %v2147 = vlaneseq
        %v2148 = vshrl.u32 %v2147, 7
        %v2149 = vsub.s32 3, %v2148
        %v2150 = vrot.slane %v2121, %v2149
        %v2151 = vlaneseq
        %v2152 = vshrl.u32 %v2151, 7
        %v2153 = vsub.s32 4, %v2152
        %v2154 = vrot.slane %v2121, %v2153
        %v2155 = vlaneseq
        %v2156 = vshrl.u32 %v2155, 7
        %v2157 = vsub.s32 5, %v2156
        %v2158 = vrot.slane %v2121, %v2157
        %v2159 = vlaneseq
        %v2160 = vshrl.u32 %v2159, 7
        %v2161 = vsub.s32 6, %v2160
        %v2162 = vrot.slane %v2121, %v2161
        %v2163 = vlaneseq
        %v2164 = vshrl.u32 %v2163, 7
        %v2165 = vsub.s32 7, %v2164
        %v2166 = vrot.slane %v2121, %v2165
        %v2167 = vlaneseq
        %v2168 = vshrl.u32 %v2167, 7
        %v2169 = vsub.s32 0, %v2168
        %v2170 = vrot.slane %v2124, %v2169
        %v2171 = vlaneseq
        %v2172 = vshrl.u32 %v2171, 7
        %v2173 = vsub.s32 1, %v2172
        %v2174 = vrot.slane %v2124, %v2173
        %v2175 = vlaneseq
        %v2176 = vshrl.u32 %v2175, 7
        %v2177 = vsub.s32 2, %v2176
        %v2178 = vrot.slane %v2124, %v2177
        %v2179 = vlaneseq
        %v2180 = vshrl.u32 %v2179, 7
        %v2181 = vsub.s32 3, %v2180
        %v2182 = vrot.slane %v2124, %v2181
        %v2183 = vlaneseq
        %v2184 = vshrl.u32 %v2183, 7
        %v2185 = vsub.s32 4, %v2184
        %v2186 = vrot.slane %v2124, %v2185
        %v2187 = vlaneseq
        %v2188 = vshrl.u32 %v2187, 7
        %v2189 = vsub.s32 5, %v2188
        %v2190 = vrot.slane %v2124, %v2189
        %v2191 = vlaneseq
        %v2192 = vshrl.u32 %v2191, 7
        %v2193 = vsub.s32 6, %v2192
        %v2194 = vrot.slane %v2124, %v2193
        %v2195 = vlaneseq
        %v2196 = vshrl.u32 %v2195, 7
        %v2197 = vsub.s32 7, %v2196
        %v2198 = vrot.slane %v2124, %v2197
        %v2199 = vlaneseq
        %v2200 = vshrl.u32 %v2199, 7
        %v2201 = vsub.s32 0, %v2200
        %v2202 = vrot.slane %v2127, %v2201
        %v2203 = vlaneseq
        %v2204 = vshrl.u32 %v2203, 7
        %v2205 = vsub.s32 1, %v2204
        %v2206 = vrot.slane %v2127, %v2205
        %v2207 = vlaneseq
        %v2208 = vshrl.u32 %v2207, 7
        %v2209 = vsub.s32 2, %v2208
        %v2210 = vrot.slane %v2127, %v2209
        %v2211 = vlaneseq
        %v2212 = vshrl.u32 %v2211, 7
        %v2213 = vsub.s32 3, %v2212
        %v2214 = vrot.slane %v2127, %v2213
        %v2215 = vlaneseq
        %v2216 = vshrl.u32 %v2215, 7
        %v2217 = vsub.s32 4, %v2216
        %v2218 = vrot.slane %v2127, %v2217
        %v2219 = vlaneseq
        %v2220 = vshrl.u32 %v2219, 7
        %v2221 = vsub.s32 5, %v2220
        %v2222 = vrot.slane %v2127, %v2221
        %v2223 = vlaneseq
        %v2224 = vshrl.u32 %v2223, 7
        %v2225 = vsub.s32 6, %v2224
        %v2226 = vrot.slane %v2127, %v2225
        %v2227 = vlaneseq
        %v2228 = vshrl.u32 %v2227, 7
        %v2229 = vsub.s32 7, %v2228
        %v2230 = vrot.slane %v2127, %v2229
        %v2231 = vlaneseq
        %v2232 = vshrl.u32 %v2231, 7
        %v2233 = vsub.s32 0, %v2232
        %v2234 = vrot.slane %v2130, %v2233
        %v2235 = vlaneseq
        %v2236 = vshrl.u32 %v2235, 7
        %v2237 = vsub.s32 1, %v2236
        %v2238 = vrot.slane %v2130, %v2237
        %v2239 = vlaneseq
        %v2240 = vshrl.u32 %v2239, 7
        %v2241 = vsub.s32 2, %v2240
        %v2242 = vrot.slane %v2130, %v2241
        %v2243 = vlaneseq
        %v2244 = vshrl.u32 %v2243, 7
        %v2245 = vsub.s32 3, %v2244
        %v2246 = vrot.slane %v2130, %v2245
        %v2247 = vlaneseq
        %v2248 = vshrl.u32 %v2247, 7
        %v2249 = vsub.s32 4, %v2248
        %v2250 = vrot.slane %v2130, %v2249
        %v2251 = vlaneseq
        %v2252 = vshrl.u32 %v2251, 7
        %v2253 = vsub.s32 5, %v2252
        %v2254 = vrot.slane %v2130, %v2253
        %v2255 = vlaneseq
        %v2256 = vshrl.u32 %v2255, 7
        %v2257 = vsub.s32 6, %v2256
        %v2258 = vrot.slane %v2130, %v2257
        %v2259 = vlaneseq
        %v2260 = vshrl.u32 %v2259, 7
        %v2261 = vsub.s32 7, %v2260
        %v2262 = vrot.slane %v2130, %v2261
        %v2295 = vrcp.pop %v2138
        %v2296 = vmul.f32 %v1768, %v2295
        %v2297 = vrcp.pop %v2142
        %v2298 = vmul.f32 %v1770, %v2297
        %v2299 = vrcp.pop %v2146
        %v2300 = vmul.f32 %v1772, %v2299
        %v2301 = vrcp.pop %v2150
        %v2302 = vmul.f32 %v1774, %v2301
        %v2303 = vrcp.pop %v2154
        %v2304 = vmul.f32 %v1776, %v2303
        %v2305 = vrcp.pop %v2158
        %v2306 = vmul.f32 %v1778, %v2305
        %v2307 = vrcp.pop %v2162
        %v2308 = vmul.f32 %v1780, %v2307
        %v2309 = vrcp.pop %v2166
        %v2310 = vmul.f32 %v1782, %v2309
        %v2311 = vrcp.pop %v2170
        %v2312 = vmul.f32 %v1784, %v2311
        %v2313 = vrcp.pop %v2174
        %v2314 = vmul.f32 %v1786, %v2313
        %v2315 = vrcp.pop %v2178
        %v2316 = vmul.f32 %v1788, %v2315
        %v2317 = vrcp.pop %v2182
        %v2318 = vmul.f32 %v1790, %v2317
        %v2319 = vrcp.pop %v2186
        %v2320 = vmul.f32 %v1792, %v2319
        %v2321 = vrcp.pop %v2190
        %v2322 = vmul.f32 %v1794, %v2321
        %v2323 = vrcp.pop %v2194
        %v2324 = vmul.f32 %v1796, %v2323
        %v2325 = vrcp.pop %v2198
        %v2326 = vmul.f32 %v1798, %v2325
        %v2327 = vrcp.pop %v2202
        %v2328 = vmul.f32 %v1800, %v2327
        %v2329 = vrcp.pop %v2206
        %v2330 = vmul.f32 %v1802, %v2329
        %v2331 = vrcp.pop %v2210
        %v2332 = vmul.f32 %v1804, %v2331
        %v2333 = vrcp.pop %v2214
        %v2334 = vmul.f32 %v1806, %v2333
        %v2335 = vrcp.pop %v2218
        %v2336 = vmul.f32 %v1808, %v2335
        %v2337 = vrcp.pop %v2222
        %v2338 = vmul.f32 %v1810, %v2337
        %v2339 = vrcp.pop %v2226
        %v2340 = vmul.f32 %v1812, %v2339
        %v2341 = vrcp.pop %v2230
        %v2342 = vmul.f32 %v1814, %v2341
        %v2343 = vrcp.pop %v2234
        %v2344 = vmul.f32 %v1816, %v2343
        %v2345 = vrcp.pop %v2238
        %v2346 = vmul.f32 %v1818, %v2345
        %v2347 = vrcp.pop %v2242
        %v2348 = vmul.f32 %v1820, %v2347
        %v2349 = vrcp.pop %v2246
        %v2350 = vmul.f32 %v1822, %v2349
        %v2351 = vrcp.pop %v2250
        %v2352 = vmul.f32 %v1824, %v2351
        %v2353 = vrcp.pop %v2254
        %v2354 = vmul.f32 %v1826, %v2353
        %v2355 = vrcp.pop %v2258
        %v2356 = vmul.f32 %v1828, %v2355
        %v2357 = vrcp.pop %v2262
        %v2358 = vmul.f32 %v1830, %v2357
        %2360 = vset.pattern.permute.xlu0 0
        %2361 = vperm.xlu0 %2360, %v2296
        %v2362 = vpop.permute.xlu0 %2361
        %2365 = vset.pattern.permute.xlu0 0
        %2366 = vperm.xlu0 %2365, %v2298
        %v2367 = vpop.permute.xlu0 %2366
        %2370 = vset.pattern.permute.xlu0 0
        %2371 = vperm.xlu0 %2370, %v2300
        %v2372 = vpop.permute.xlu0 %2371
        %2375 = vset.pattern.permute.xlu0 0
        %2376 = vperm.xlu0 %2375, %v2302
        %v2377 = vpop.permute.xlu0 %2376
        %2380 = vset.pattern.permute.xlu0 0
        %2381 = vperm.xlu0 %2380, %v2304
        %v2382 = vpop.permute.xlu0 %2381
        %2385 = vset.pattern.permute.xlu0 0
        %2386 = vperm.xlu0 %2385, %v2306
        %v2387 = vpop.permute.xlu0 %2386
        %2390 = vset.pattern.permute.xlu0 0
        %2391 = vperm.xlu0 %2390, %v2308
        %v2392 = vpop.permute.xlu0 %2391
        %2395 = vset.pattern.permute.xlu0 0
        %2396 = vperm.xlu0 %2395, %v2310
        %v2397 = vpop.permute.xlu0 %2396
        %2400 = vset.pattern.permute.xlu0 0
        %2401 = vperm.xlu0 %2400, %v2312
        %v2402 = vpop.permute.xlu0 %2401
        %2405 = vset.pattern.permute.xlu0 0
        %2406 = vperm.xlu0 %2405, %v2314
        %v2407 = vpop.permute.xlu0 %2406
        %2410 = vset.pattern.permute.xlu0 0
        %2411 = vperm.xlu0 %2410, %v2316
        %v2412 = vpop.permute.xlu0 %2411
        %2415 = vset.pattern.permute.xlu0 0
        %2416 = vperm.xlu0 %2415, %v2318
        %v2417 = vpop.permute.xlu0 %2416
        %2420 = vset.pattern.permute.xlu0 0
        %2421 = vperm.xlu0 %2420, %v2320
        %v2422 = vpop.permute.xlu0 %2421
        %2425 = vset.pattern.permute.xlu0 0
        %2426 = vperm.xlu0 %2425, %v2322
        %v2427 = vpop.permute.xlu0 %2426
        %2430 = vset.pattern.permute.xlu0 0
        %2431 = vperm.xlu0 %2430, %v2324
        %v2432 = vpop.permute.xlu0 %2431
        %2435 = vset.pattern.permute.xlu0 0
        %2436 = vperm.xlu0 %2435, %v2326
        %v2437 = vpop.permute.xlu0 %2436
        %2440 = vset.pattern.permute.xlu0 0
        %2441 = vperm.xlu0 %2440, %v2328
        %v2442 = vpop.permute.xlu0 %2441
        %2445 = vset.pattern.permute.xlu0 0
        %2446 = vperm.xlu0 %2445, %v2330
        %v2447 = vpop.permute.xlu0 %2446
        %2450 = vset.pattern.permute.xlu0 0
        %2451 = vperm.xlu0 %2450, %v2332
        %v2452 = vpop.permute.xlu0 %2451
        %2455 = vset.pattern.permute.xlu0 0
        %2456 = vperm.xlu0 %2455, %v2334
        %v2457 = vpop.permute.xlu0 %2456
        %2460 = vset.pattern.permute.xlu0 0
        %2461 = vperm.xlu0 %2460, %v2336
        %v2462 = vpop.permute.xlu0 %2461
        %2465 = vset.pattern.permute.xlu0 0
        %2466 = vperm.xlu0 %2465, %v2338
        %v2467 = vpop.permute.xlu0 %2466
        %2470 = vset.pattern.permute.xlu0 0
        %2471 = vperm.xlu0 %2470, %v2340
        %v2472 = vpop.permute.xlu0 %2471
        %2475 = vset.pattern.permute.xlu0 0
        %2476 = vperm.xlu0 %2475, %v2342
        %v2477 = vpop.permute.xlu0 %2476
        %2480 = vset.pattern.permute.xlu0 0
        %2481 = vperm.xlu0 %2480, %v2344
        %v2482 = vpop.permute.xlu0 %2481
        %2485 = vset.pattern.permute.xlu0 0
        %2486 = vperm.xlu0 %2485, %v2346
        %v2487 = vpop.permute.xlu0 %2486
        %2490 = vset.pattern.permute.xlu0 0
        %2491 = vperm.xlu0 %2490, %v2348
        %v2492 = vpop.permute.xlu0 %2491
        %2495 = vset.pattern.permute.xlu0 0
        %2496 = vperm.xlu0 %2495, %v2350
        %v2497 = vpop.permute.xlu0 %2496
        %2500 = vset.pattern.permute.xlu0 0
        %2501 = vperm.xlu0 %2500, %v2352
        %v2502 = vpop.permute.xlu0 %2501
        %2505 = vset.pattern.permute.xlu0 0
        %2506 = vperm.xlu0 %2505, %v2354
        %v2507 = vpop.permute.xlu0 %2506
        %2510 = vset.pattern.permute.xlu0 0
        %2511 = vperm.xlu0 %2510, %v2356
        %v2512 = vpop.permute.xlu0 %2511
        %2515 = vset.pattern.permute.xlu0 0
        %2516 = vperm.xlu0 %2515, %v2358
        %v2517 = vpop.permute.xlu0 %2516
        %v2519 = vmul.f32 %v411, %v2362
        %v2520 = vmul.f32 %v412, %v2367
        %v2521 = vmul.f32 %v413, %v2372
        %v2522 = vmul.f32 %v414, %v2377
        %v2523 = vmul.f32 %v415, %v2382
        %v2524 = vmul.f32 %v416, %v2387
        %v2525 = vmul.f32 %v417, %v2392
        %v2526 = vmul.f32 %v418, %v2397
        %v2527 = vmul.f32 %v419, %v2402
        %v2528 = vmul.f32 %v420, %v2407
        %v2529 = vmul.f32 %v421, %v2412
        %v2530 = vmul.f32 %v422, %v2417
        %v2531 = vmul.f32 %v423, %v2422
        %v2532 = vmul.f32 %v424, %v2427
        %v2533 = vmul.f32 %v425, %v2432
        %v2534 = vmul.f32 %v426, %v2437
        %v2535 = vmul.f32 %v427, %v2442
        %v2536 = vmul.f32 %v428, %v2447
        %v2537 = vmul.f32 %v429, %v2452
        %v2538 = vmul.f32 %v430, %v2457
        %v2539 = vmul.f32 %v431, %v2462
        %v2540 = vmul.f32 %v432, %v2467
        %v2541 = vmul.f32 %v433, %v2472
        %v2542 = vmul.f32 %v434, %v2477
        %v2543 = vmul.f32 %v435, %v2482
        %v2544 = vmul.f32 %v436, %v2487
        %v2545 = vmul.f32 %v437, %v2492
        %v2546 = vmul.f32 %v438, %v2497
        %v2547 = vmul.f32 %v439, %v2502
        %v2548 = vmul.f32 %v440, %v2507
        %v2549 = vmul.f32 %v441, %v2512
        %v2550 = vmul.f32 %v442, %v2517
        %v2551 = vrot.slane %v2519, 4
        %v2552 = vadd.f32 %v2519, %v2551
        %v2553 = vrot.slane %v2552, 2
        %v2554 = vadd.f32 %v2552, %v2553
        %v2555 = vrot.slane %v2554, 1
        %v2556 = vadd.f32 %v2554, %v2555
        %v2557 = vrot.slane %v2520, 4
        %v2558 = vadd.f32 %v2520, %v2557
        %v2559 = vrot.slane %v2558, 2
        %v2560 = vadd.f32 %v2558, %v2559
        %v2561 = vrot.slane %v2560, 1
        %v2562 = vadd.f32 %v2560, %v2561
        %v2563 = vrot.slane %v2521, 4
        %v2564 = vadd.f32 %v2521, %v2563
        %v2565 = vrot.slane %v2564, 2
        %v2566 = vadd.f32 %v2564, %v2565
        %v2567 = vrot.slane %v2566, 1
        %v2568 = vadd.f32 %v2566, %v2567
        %v2569 = vrot.slane %v2522, 4
        %v2570 = vadd.f32 %v2522, %v2569
        %v2571 = vrot.slane %v2570, 2
        %v2572 = vadd.f32 %v2570, %v2571
        %v2573 = vrot.slane %v2572, 1
        %v2574 = vadd.f32 %v2572, %v2573
        %v2575 = vrot.slane %v2523, 4
        %v2576 = vadd.f32 %v2523, %v2575
        %v2577 = vrot.slane %v2576, 2
        %v2578 = vadd.f32 %v2576, %v2577
        %v2579 = vrot.slane %v2578, 1
        %v2580 = vadd.f32 %v2578, %v2579
        %v2581 = vrot.slane %v2524, 4
        %v2582 = vadd.f32 %v2524, %v2581
        %v2583 = vrot.slane %v2582, 2
        %v2584 = vadd.f32 %v2582, %v2583
        %v2585 = vrot.slane %v2584, 1
        %v2586 = vadd.f32 %v2584, %v2585
        %v2587 = vrot.slane %v2525, 4
        %v2588 = vadd.f32 %v2525, %v2587
        %v2589 = vrot.slane %v2588, 2
        %v2590 = vadd.f32 %v2588, %v2589
        %v2591 = vrot.slane %v2590, 1
        %v2592 = vadd.f32 %v2590, %v2591
        %v2593 = vrot.slane %v2526, 4
        %v2594 = vadd.f32 %v2526, %v2593
        %v2595 = vrot.slane %v2594, 2
        %v2596 = vadd.f32 %v2594, %v2595
        %v2597 = vrot.slane %v2596, 1
        %v2598 = vadd.f32 %v2596, %v2597
        %v2599 = vrot.slane %v2527, 4
        %v2600 = vadd.f32 %v2527, %v2599
        %v2601 = vrot.slane %v2600, 2
        %v2602 = vadd.f32 %v2600, %v2601
        %v2603 = vrot.slane %v2602, 1
        %v2604 = vadd.f32 %v2602, %v2603
        %v2605 = vrot.slane %v2528, 4
        %v2606 = vadd.f32 %v2528, %v2605
        %v2607 = vrot.slane %v2606, 2
        %v2608 = vadd.f32 %v2606, %v2607
        %v2609 = vrot.slane %v2608, 1
        %v2610 = vadd.f32 %v2608, %v2609
        %v2611 = vrot.slane %v2529, 4
        %v2612 = vadd.f32 %v2529, %v2611
        %v2613 = vrot.slane %v2612, 2
        %v2614 = vadd.f32 %v2612, %v2613
        %v2615 = vrot.slane %v2614, 1
        %v2616 = vadd.f32 %v2614, %v2615
        %v2617 = vrot.slane %v2530, 4
        %v2618 = vadd.f32 %v2530, %v2617
        %v2619 = vrot.slane %v2618, 2
        %v2620 = vadd.f32 %v2618, %v2619
        %v2621 = vrot.slane %v2620, 1
        %v2622 = vadd.f32 %v2620, %v2621
        %v2623 = vrot.slane %v2531, 4
        %v2624 = vadd.f32 %v2531, %v2623
        %v2625 = vrot.slane %v2624, 2
        %v2626 = vadd.f32 %v2624, %v2625
        %v2627 = vrot.slane %v2626, 1
        %v2628 = vadd.f32 %v2626, %v2627
        %v2629 = vrot.slane %v2532, 4
        %v2630 = vadd.f32 %v2532, %v2629
        %v2631 = vrot.slane %v2630, 2
        %v2632 = vadd.f32 %v2630, %v2631
        %v2633 = vrot.slane %v2632, 1
        %v2634 = vadd.f32 %v2632, %v2633
        %v2635 = vrot.slane %v2533, 4
        %v2636 = vadd.f32 %v2533, %v2635
        %v2637 = vrot.slane %v2636, 2
        %v2638 = vadd.f32 %v2636, %v2637
        %v2639 = vrot.slane %v2638, 1
        %v2640 = vadd.f32 %v2638, %v2639
        %v2641 = vrot.slane %v2534, 4
        %v2642 = vadd.f32 %v2534, %v2641
        %v2643 = vrot.slane %v2642, 2
        %v2644 = vadd.f32 %v2642, %v2643
        %v2645 = vrot.slane %v2644, 1
        %v2646 = vadd.f32 %v2644, %v2645
        %v2647 = vrot.slane %v2535, 4
        %v2648 = vadd.f32 %v2535, %v2647
        %v2649 = vrot.slane %v2648, 2
        %v2650 = vadd.f32 %v2648, %v2649
        %v2651 = vrot.slane %v2650, 1
        %v2652 = vadd.f32 %v2650, %v2651
        %v2653 = vrot.slane %v2536, 4
        %v2654 = vadd.f32 %v2536, %v2653
        %v2655 = vrot.slane %v2654, 2
        %v2656 = vadd.f32 %v2654, %v2655
        %v2657 = vrot.slane %v2656, 1
        %v2658 = vadd.f32 %v2656, %v2657
        %v2659 = vrot.slane %v2537, 4
        %v2660 = vadd.f32 %v2537, %v2659
        %v2661 = vrot.slane %v2660, 2
        %v2662 = vadd.f32 %v2660, %v2661
        %v2663 = vrot.slane %v2662, 1
        %v2664 = vadd.f32 %v2662, %v2663
        %v2665 = vrot.slane %v2538, 4
        %v2666 = vadd.f32 %v2538, %v2665
        %v2667 = vrot.slane %v2666, 2
        %v2668 = vadd.f32 %v2666, %v2667
        %v2669 = vrot.slane %v2668, 1
        %v2670 = vadd.f32 %v2668, %v2669
        %v2671 = vrot.slane %v2539, 4
        %v2672 = vadd.f32 %v2539, %v2671
        %v2673 = vrot.slane %v2672, 2
        %v2674 = vadd.f32 %v2672, %v2673
        %v2675 = vrot.slane %v2674, 1
        %v2676 = vadd.f32 %v2674, %v2675
        %v2677 = vrot.slane %v2540, 4
        %v2678 = vadd.f32 %v2540, %v2677
        %v2679 = vrot.slane %v2678, 2
        %v2680 = vadd.f32 %v2678, %v2679
        %v2681 = vrot.slane %v2680, 1
        %v2682 = vadd.f32 %v2680, %v2681
        %v2683 = vrot.slane %v2541, 4
        %v2684 = vadd.f32 %v2541, %v2683
        %v2685 = vrot.slane %v2684, 2
        %v2686 = vadd.f32 %v2684, %v2685
        %v2687 = vrot.slane %v2686, 1
        %v2688 = vadd.f32 %v2686, %v2687
        %v2689 = vrot.slane %v2542, 4
        %v2690 = vadd.f32 %v2542, %v2689
        %v2691 = vrot.slane %v2690, 2
        %v2692 = vadd.f32 %v2690, %v2691
        %v2693 = vrot.slane %v2692, 1
        %v2694 = vadd.f32 %v2692, %v2693
        %v2695 = vrot.slane %v2543, 4
        %v2696 = vadd.f32 %v2543, %v2695
        %v2697 = vrot.slane %v2696, 2
        %v2698 = vadd.f32 %v2696, %v2697
        %v2699 = vrot.slane %v2698, 1
        %v2700 = vadd.f32 %v2698, %v2699
        %v2701 = vrot.slane %v2544, 4
        %v2702 = vadd.f32 %v2544, %v2701
        %v2703 = vrot.slane %v2702, 2
        %v2704 = vadd.f32 %v2702, %v2703
        %v2705 = vrot.slane %v2704, 1
        %v2706 = vadd.f32 %v2704, %v2705
        %v2707 = vrot.slane %v2545, 4
        %v2708 = vadd.f32 %v2545, %v2707
        %v2709 = vrot.slane %v2708, 2
        %v2710 = vadd.f32 %v2708, %v2709
        %v2711 = vrot.slane %v2710, 1
        %v2712 = vadd.f32 %v2710, %v2711
        %v2713 = vrot.slane %v2546, 4
        %v2714 = vadd.f32 %v2546, %v2713
        %v2715 = vrot.slane %v2714, 2
        %v2716 = vadd.f32 %v2714, %v2715
        %v2717 = vrot.slane %v2716, 1
        %v2718 = vadd.f32 %v2716, %v2717
        %v2719 = vrot.slane %v2547, 4
        %v2720 = vadd.f32 %v2547, %v2719
        %v2721 = vrot.slane %v2720, 2
        %v2722 = vadd.f32 %v2720, %v2721
        %v2723 = vrot.slane %v2722, 1
        %v2724 = vadd.f32 %v2722, %v2723
        %v2725 = vrot.slane %v2548, 4
        %v2726 = vadd.f32 %v2548, %v2725
        %v2727 = vrot.slane %v2726, 2
        %v2728 = vadd.f32 %v2726, %v2727
        %v2729 = vrot.slane %v2728, 1
        %v2730 = vadd.f32 %v2728, %v2729
        %v2731 = vrot.slane %v2549, 4
        %v2732 = vadd.f32 %v2549, %v2731
        %v2733 = vrot.slane %v2732, 2
        %v2734 = vadd.f32 %v2732, %v2733
        %v2735 = vrot.slane %v2734, 1
        %v2736 = vadd.f32 %v2734, %v2735
        %v2737 = vrot.slane %v2550, 4
        %v2738 = vadd.f32 %v2550, %v2737
        %v2739 = vrot.slane %v2738, 2
        %v2740 = vadd.f32 %v2738, %v2739
        %v2741 = vrot.slane %v2740, 1
        %v2742 = vadd.f32 %v2740, %v2741
        %v2775 = vsel %vm1519, %v2562, %v2556
        %v2776 = vsel %vm1521, %v2568, %v2775
        %v2777 = vsel %vm1523, %v2574, %v2776
        %v2778 = vsel %vm1525, %v2580, %v2777
        %v2779 = vsel %vm1527, %v2586, %v2778
        %v2780 = vsel %vm1529, %v2592, %v2779
        %v2781 = vsel %vm1531, %v2598, %v2780
        %v2782 = vsel %vm1519, %v2610, %v2604
        %v2783 = vsel %vm1521, %v2616, %v2782
        %v2784 = vsel %vm1523, %v2622, %v2783
        %v2785 = vsel %vm1525, %v2628, %v2784
        %v2786 = vsel %vm1527, %v2634, %v2785
        %v2787 = vsel %vm1529, %v2640, %v2786
        %v2788 = vsel %vm1531, %v2646, %v2787
        %v2789 = vsel %vm1519, %v2658, %v2652
        %v2790 = vsel %vm1521, %v2664, %v2789
        %v2791 = vsel %vm1523, %v2670, %v2790
        %v2792 = vsel %vm1525, %v2676, %v2791
        %v2793 = vsel %vm1527, %v2682, %v2792
        %v2794 = vsel %vm1529, %v2688, %v2793
        %v2795 = vsel %vm1531, %v2694, %v2794
        %v2796 = vsel %vm1519, %v2706, %v2700
        %v2797 = vsel %vm1521, %v2712, %v2796
        %v2798 = vsel %vm1523, %v2718, %v2797
        %v2799 = vsel %vm1525, %v2724, %v2798
        %v2800 = vsel %vm1527, %v2730, %v2799
        %v2801 = vsel %vm1529, %v2736, %v2800
        %v2802 = vsel %vm1531, %v2742, %v2801
        %2807 = vst [vmem:[%s394] sm:$0xff] %v2781
        %2808 = vst [vmem:[%s394 + $0x8] sm:$0xff] %v2788
        %2809 = vst [vmem:[%s394 + $0x10] sm:$0xff] %v2795
        %2810 = vst [vmem:[%s394 + $0x18] sm:$0xff] %v2802
        %v2811 = vlaneseq
        %v2812 = vshrl.u32 %v2811, 7
        %v2813 = vsub.s32 %v1390, %v2812
        %v2814 = vrot.slane %v2362, %v2813
        %v2815 = vlaneseq
        %v2816 = vshrl.u32 %v2815, 7
        %v2817 = vsub.s32 %v1390, %v2816
        %v2818 = vrot.slane %v2367, %v2817
        %v2819 = vlaneseq
        %v2820 = vshrl.u32 %v2819, 7
        %v2821 = vsub.s32 %v1390, %v2820
        %v2822 = vrot.slane %v2372, %v2821
        %v2823 = vlaneseq
        %v2824 = vshrl.u32 %v2823, 7
        %v2825 = vsub.s32 %v1390, %v2824
        %v2826 = vrot.slane %v2377, %v2825
        %v2827 = vlaneseq
        %v2828 = vshrl.u32 %v2827, 7
        %v2829 = vsub.s32 %v1390, %v2828
        %v2830 = vrot.slane %v2382, %v2829
        %v2831 = vlaneseq
        %v2832 = vshrl.u32 %v2831, 7
        %v2833 = vsub.s32 %v1390, %v2832
        %v2834 = vrot.slane %v2387, %v2833
        %v2835 = vlaneseq
        %v2836 = vshrl.u32 %v2835, 7
        %v2837 = vsub.s32 %v1390, %v2836
        %v2838 = vrot.slane %v2392, %v2837
        %v2839 = vlaneseq
        %v2840 = vshrl.u32 %v2839, 7
        %v2841 = vsub.s32 %v1390, %v2840
        %v2842 = vrot.slane %v2397, %v2841
        %v2843 = vlaneseq
        %v2844 = vshrl.u32 %v2843, 7
        %v2845 = vsub.s32 %v1390, %v2844
        %v2846 = vrot.slane %v2402, %v2845
        %v2847 = vlaneseq
        %v2848 = vshrl.u32 %v2847, 7
        %v2849 = vsub.s32 %v1390, %v2848
        %v2850 = vrot.slane %v2407, %v2849
        %v2851 = vlaneseq
        %v2852 = vshrl.u32 %v2851, 7
        %v2853 = vsub.s32 %v1390, %v2852
        %v2854 = vrot.slane %v2412, %v2853
        %v2855 = vlaneseq
        %v2856 = vshrl.u32 %v2855, 7
        %v2857 = vsub.s32 %v1390, %v2856
        %v2858 = vrot.slane %v2417, %v2857
        %v2859 = vlaneseq
        %v2860 = vshrl.u32 %v2859, 7
        %v2861 = vsub.s32 %v1390, %v2860
        %v2862 = vrot.slane %v2422, %v2861
        %v2863 = vlaneseq
        %v2864 = vshrl.u32 %v2863, 7
        %v2865 = vsub.s32 %v1390, %v2864
        %v2866 = vrot.slane %v2427, %v2865
        %v2867 = vlaneseq
        %v2868 = vshrl.u32 %v2867, 7
        %v2869 = vsub.s32 %v1390, %v2868
        %v2870 = vrot.slane %v2432, %v2869
        %v2871 = vlaneseq
        %v2872 = vshrl.u32 %v2871, 7
        %v2873 = vsub.s32 %v1390, %v2872
        %v2874 = vrot.slane %v2437, %v2873
        %v2875 = vlaneseq
        %v2876 = vshrl.u32 %v2875, 7
        %v2877 = vsub.s32 %v1390, %v2876
        %v2878 = vrot.slane %v2442, %v2877
        %v2879 = vlaneseq
        %v2880 = vshrl.u32 %v2879, 7
        %v2881 = vsub.s32 %v1390, %v2880
        %v2882 = vrot.slane %v2447, %v2881
        %v2883 = vlaneseq
        %v2884 = vshrl.u32 %v2883, 7
        %v2885 = vsub.s32 %v1390, %v2884
        %v2886 = vrot.slane %v2452, %v2885
        %v2887 = vlaneseq
        %v2888 = vshrl.u32 %v2887, 7
        %v2889 = vsub.s32 %v1390, %v2888
        %v2890 = vrot.slane %v2457, %v2889
        %v2891 = vlaneseq
        %v2892 = vshrl.u32 %v2891, 7
        %v2893 = vsub.s32 %v1390, %v2892
        %v2894 = vrot.slane %v2462, %v2893
        %v2895 = vlaneseq
        %v2896 = vshrl.u32 %v2895, 7
        %v2897 = vsub.s32 %v1390, %v2896
        %v2898 = vrot.slane %v2467, %v2897
        %v2899 = vlaneseq
        %v2900 = vshrl.u32 %v2899, 7
        %v2901 = vsub.s32 %v1390, %v2900
        %v2902 = vrot.slane %v2472, %v2901
        %v2903 = vlaneseq
        %v2904 = vshrl.u32 %v2903, 7
        %v2905 = vsub.s32 %v1390, %v2904
        %v2906 = vrot.slane %v2477, %v2905
        %v2907 = vlaneseq
        %v2908 = vshrl.u32 %v2907, 7
        %v2909 = vsub.s32 %v1390, %v2908
        %v2910 = vrot.slane %v2482, %v2909
        %v2911 = vlaneseq
        %v2912 = vshrl.u32 %v2911, 7
        %v2913 = vsub.s32 %v1390, %v2912
        %v2914 = vrot.slane %v2487, %v2913
        %v2915 = vlaneseq
        %v2916 = vshrl.u32 %v2915, 7
        %v2917 = vsub.s32 %v1390, %v2916
        %v2918 = vrot.slane %v2492, %v2917
        %v2919 = vlaneseq
        %v2920 = vshrl.u32 %v2919, 7
        %v2921 = vsub.s32 %v1390, %v2920
        %v2922 = vrot.slane %v2497, %v2921
        %v2923 = vlaneseq
        %v2924 = vshrl.u32 %v2923, 7
        %v2925 = vsub.s32 %v1390, %v2924
        %v2926 = vrot.slane %v2502, %v2925
        %v2927 = vlaneseq
        %v2928 = vshrl.u32 %v2927, 7
        %v2929 = vsub.s32 %v1390, %v2928
        %v2930 = vrot.slane %v2507, %v2929
        %v2931 = vlaneseq
        %v2932 = vshrl.u32 %v2931, 7
        %v2933 = vsub.s32 %v1390, %v2932
        %v2934 = vrot.slane %v2512, %v2933
        %v2935 = vlaneseq
        %v2936 = vshrl.u32 %v2935, 7
        %v2937 = vsub.s32 %v1390, %v2936
        %v2938 = vrot.slane %v2517, %v2937
        %v2939 = vsel %vm1519, %v2818, %v2814
        %v2940 = vsel %vm1521, %v2822, %v2939
        %v2941 = vsel %vm1523, %v2826, %v2940
        %v2942 = vsel %vm1525, %v2830, %v2941
        %v2943 = vsel %vm1527, %v2834, %v2942
        %v2944 = vsel %vm1529, %v2838, %v2943
        %v2945 = vsel %vm1531, %v2842, %v2944
        %v2946 = vsel %vm1519, %v2850, %v2846
        %v2947 = vsel %vm1521, %v2854, %v2946
        %v2948 = vsel %vm1523, %v2858, %v2947
        %v2949 = vsel %vm1525, %v2862, %v2948
        %v2950 = vsel %vm1527, %v2866, %v2949
        %v2951 = vsel %vm1529, %v2870, %v2950
        %v2952 = vsel %vm1531, %v2874, %v2951
        %v2953 = vsel %vm1519, %v2882, %v2878
        %v2954 = vsel %vm1521, %v2886, %v2953
        %v2955 = vsel %vm1523, %v2890, %v2954
        %v2956 = vsel %vm1525, %v2894, %v2955
        %v2957 = vsel %vm1527, %v2898, %v2956
        %v2958 = vsel %vm1529, %v2902, %v2957
        %v2959 = vsel %vm1531, %v2906, %v2958
        %v2960 = vsel %vm1519, %v2914, %v2910
        %v2961 = vsel %vm1521, %v2918, %v2960
        %v2962 = vsel %vm1523, %v2922, %v2961
        %v2963 = vsel %vm1525, %v2926, %v2962
        %v2964 = vsel %vm1527, %v2930, %v2963
        %v2965 = vsel %vm1529, %v2934, %v2964
        %v2966 = vsel %vm1531, %v2938, %v2965
        %2971 = vst.msk [vmem:[%s409] sm:$0xff] %vm1558, %v2945
        %2972 = vst.msk [vmem:[%s409 + $0x8] sm:$0xff] %vm1558, %v2952
        %2973 = vst.msk [vmem:[%s409 + $0x10] sm:$0xff] %vm1558, %v2959
        %2974 = vst.msk [vmem:[%s409 + $0x18] sm:$0xff] %vm1558, %v2966
        %s2975 = sand.u32 %s196, 1
        %s2976 = scalar_lea.sflag [#allocation5], %s2975
        %s2977 = sand.u32 %s196, 1
        %s2978 = smul.addr %s2977, 32
        %s2979 = scalar_lea.vmem [#allocation11], %s2978
        %s2980 = smul.u32 4, %s31
        %p2981 = scmp.lt.s32.totalorder %s2980, 7
        %s2982 = scalar_select %p2981, %s2980, 7
        %s2983 = smul.addr %s2982, 8
        %s2984 = scalar_lea.vmem %s8, %s2983
        // Predicated region
        $region65: #{tpu_custom_call.1} parent=47 // pred_check
          %p2985 = pneg %p206
        $region66: #{tpu_custom_call.1} parent=47 // pred_check_branch
          %2987 = sbr.rel (%p2985) target = $region68
        $region67: #{tpu_custom_call.1} parent=47 // pred_region
          %s2988 = smul.u32 4, %s31
          %s2990 = ssub.s32 512, 512
          %2991 = vsyncadd %s2976, %s2990
          %s2992 = smul.addr %s2988, 128
          %s2993 = scalar_lea.hbm %s7, %s2992
          %s2994 = sshll.u32 %s2979, 4
          %s2995 = int_to_ptr.vmem [resolvable:$true] %s2994
          %3000 = dma.vmem_to_hbm [thread:$0]  %s2995, 512, %s2993, %s2976, 128, 128, 8
        $region68: #{tpu_custom_call.1} parent=47 // pred_fallthru
          _
        // Predicated region
        $region69: #{tpu_custom_call.1} parent=47 // pred_check
          %p3001 = pneg %p232
        $region70: #{tpu_custom_call.1} parent=47 // pred_check_branch
          %3003 = sbr.rel (%p3001) target = $region72
        $region71: #{tpu_custom_call.1} parent=47 // pred_region
          %s3004 = smul.u32 4, %s31
        $region72: #{tpu_custom_call.1} parent=47 // pred_fallthru
          _
      $region48: #{tpu_custom_call.1} parent=5 // pred_fallthru
        _
      %p3005 = scmp.le.s32.totalorder 2, %s26
      // Predicated region
      $region73: #{tpu_custom_call.1} parent=5 // pred_check
        %p3006 = pneg %p3005
      $region74: #{tpu_custom_call.1} parent=5 // pred_check_branch
        %3008 = sbr.rel (%p3006) target = $region76
      $region75: #{tpu_custom_call.1} parent=5 // pred_region
        %s3009 = ssub.s32 %s26, 2
        // Predicated region
        $region77: #{tpu_custom_call.1} parent=75 // pred_check
          %p3010 = pneg %p212
        $region78: #{tpu_custom_call.1} parent=75 // pred_check_branch
          %3012 = sbr.rel (%p3010) target = $region80
        $region79: #{tpu_custom_call.1} parent=75 // pred_region
          %s3013 = sand.u32 %s197, 1
          %s3014 = scalar_lea.sflag [#allocation5], %s3013
          %s3015 = sand.u32 %s197, 1
          %s3016 = smul.addr %s3015, 32
          %s3017 = scalar_lea.vmem [#allocation11], %s3016
          %3018 = dma.done %s3014, 512
        $region80: #{tpu_custom_call.1} parent=75 // pred_fallthru
          _
        // Predicated region
        $region81: #{tpu_custom_call.1} parent=75 // pred_check
          %p3019 = pneg %p238
        $region82: #{tpu_custom_call.1} parent=75 // pred_check_branch
          %3021 = sbr.rel (%p3019) target = $region84
        $region83: #{tpu_custom_call.1} parent=75 // pred_region
          %s3022 = smul.u32 4, %s32
          %p3023 = scmp.lt.s32.totalorder %s3022, 7
          %s3024 = scalar_select %p3023, %s3022, 7
          %s3025 = smul.addr %s3024, 8
          %s3026 = scalar_lea.vmem %s8, %s3025
        $region84: #{tpu_custom_call.1} parent=75 // pred_fallthru
          _
      $region76: #{tpu_custom_call.1} parent=5 // pred_fallthru
        _
    $region6: #{tpu_custom_call.1} parent=1 // loop_footer
      %s30 = sadd.s32 1, %s26
    $region7: #{tpu_custom_call.1} parent=1 // loop_footer_branch
      %25 = sbr.rel target = $region3
    $region8: #{tpu_custom_call.1} parent=1 // loop_exit
      _
    %3027 = vsyncpa [#allocation4], 1
    %s3028 = scalar_lea.sflag [#allocation4], 1
    %3029 = vsyncpa %s3028, 1
    %3030 = vsyncpa [#allocation7], 1
    %s3031 = scalar_lea.sflag [#allocation7], 1
    %3032 = vsyncpa %s3031, 1
    %3033 = vsyncpa [#allocation10], 1
    %3034 = vsyncpa [#allocation5], 1
    %s3035 = scalar_lea.sflag [#allocation5], 1
    %3036 = vsyncpa %s3035, 1

</llo_original>
